<compile_context>
chip_gen: v7x
topology: tpu7x:2x2x1
jax: 0.10.0
libtpu: 0.0.40
codegen_flags: <defaults>
</compile_context>

<pallas_src>
import functools

import jax
import jax.numpy as jnp
import numpy as np
from jax.experimental import pallas as pl
from jax.experimental.pallas import tpu as pltpu


def _pconv_kernel(p_ref, w_ref, b_ref, out_ref, nm_ref, acc_ref,
                  *, kh, kw, wp, cout):
    """One output row-band per grid step (all refs in VMEM).

    p_ref   : (Cin+1, L_in)   band of the padded image, channels = [x*m ; msum],
                              spatial flattened row-major (y, x) on width Wp.
                              L_in = (band_rows + kh) * Wp.
    w_ref   : (KH*KW, Cout+1, Cin+1)  per-tap augmented weights.
    b_ref   : (Cout, 1)       bias.
    out_ref : (Cout, L_out)   dense conv output for the band, L_out = band_rows*Wp.
    nm_ref  : (1, L_out)      updated mask (one value per spatial location).
    acc_ref : (Cout+1, L_out) f32 scratch accumulator.
    """
    l_out = out_ref.shape[-1]

    # In flattened (y, x) coordinates tap (i, j) is a static lane shift of
    # i*Wp + j:  out[p] += W_ij @ band[:, p + i*Wp + j].
    acc_ref[...] = jnp.dot(w_ref[0], p_ref[:, 0:l_out],
                           preferred_element_type=jnp.float32)
    for t in range(1, kh * kw):
        i, j = divmod(t, kw)
        d = i * wp + j
        acc_ref[...] += jnp.dot(w_ref[t], p_ref[:, d:d + l_out],
                                preferred_element_type=jnp.float32)

    acc = acc_ref[...]
    conv = acc[:cout, :]                     # conv(x*m), no bias
    msum = acc[cout:cout + 1, :]             # conv(m, ones): exact small integers
    holes = msum == 0.0
    # Exact reciprocal (approx=True is the EUP fast path; kept exact for the
    # 1e-4 tolerance — epilogue is not the binding unit anyway).
    inv = pl.reciprocal(jnp.where(holes, 1.0, msum), approx=False)
    out_ref[...] = jnp.where(holes, 0.0, conv * inv + b_ref[...]).astype(out_ref.dtype)
    nm_ref[...] = jnp.where(holes, 0.0, 1.0).astype(nm_ref.dtype)


def _cdiv(a, b):
    return -(-a // b)


def _pick_band_rows(ho_dense, wp, c_aug, cout, n_batch,
                    vmem_budget_bytes=16 * 1024 * 1024, min_steps=4):
    """Output rows per band: as large as the VMEM budget allows (double
    buffered f32 input band + output tiles), then shrunk until the grid has at
    least `min_steps` steps so both v7x TensorCores get balanced work."""
    bytes_per_row = 4 * wp * (2 * c_aug + 2 * (cout + 2))
    r = max(1, min(ho_dense, vmem_budget_bytes // bytes_per_row))
    while n_batch * _cdiv(ho_dense, r) < min_steps and r > 1:
        r = _cdiv(r, 2)
    return r


def partial_conv2d(x_nchw, m_nchw, weight_oihw, bias, *, stride=1, padding=0):
    """PartialCoXv forward. NCHW in / NCHW out (PyTorch layout)."""
    x_nchw = x_nchw.astype(jnp.float32)
    m_nchw = m_nchw.astype(jnp.float32)
    weight_oihw = weight_oihw.astype(jnp.float32)
    bias = bias.astype(jnp.float32)

    n, cin, h, w_in = x_nchw.shape
    cout, cin_w, kh, kw = weight_oihw.shape
    # TODO(synk): groups != 1 and dilation != 1 are not implemented (module defaults used).
    assert cin_w == cin, "groups != 1 not supported"

    hp = h + 2 * padding
    wp = w_in + 2 * padding
    ho = (hp - kh) // stride + 1
    wo = (wp - kw) // stride + 1
    ho_dense = hp - kh + 1                   # stride-1 (dense) output rows

    # ---- tiny wrapper-side prep: channel-first, no transposes, no im2col ----
    xm = x_nchw * m_nchw                                   # (N, Cin, H, W)
    msum = jnp.sum(m_nchw, axis=1, keepdims=True)          # mask pre-reduced over Cin
    data = jnp.concatenate([xm, msum], axis=1)             # (N, Cin+1, H, W)
    c_aug = cin + 1

    r_b = _pick_band_rows(ho_dense, wp, c_aug, cout, n)
    n_bands = _cdiv(ho_dense, r_b)
    nb = n * n_bands

    # conv zero-padding + enough extra bottom rows that every band can read
    # (r_b + kh) rows (covers the kh-1 halo and the kw-1 flattened spill-over).
    rows_needed = n_bands * r_b + kh
    pad_bottom = rows_needed - (h + padding)
    data = jnp.pad(data, ((0, 0), (0, 0), (padding, pad_bottom), (padding, padding)))

    # Overlapping row bands (halo duplicated once in HBM: ~kh/r_b byte overhead).
    band_rows_in = r_b + kh
    bands = jnp.stack(
        [data[:, :, b * r_b: b * r_b + band_rows_in, :] for b in range(n_bands)],
        axis=1)                                            # (N, n_bands, C', band_rows_in, Wp)
    bands = bands.reshape(nb, c_aug, band_rows_in * wp)    # (NB, C', L_in)

    l_in = band_rows_in * wp
    l_out = r_b * wp

    # Per-tap augmented weights: (KH*KW, Cout+1, Cin+1).
    w_taps = jnp.transpose(weight_oihw, (2, 3, 0, 1)).reshape(kh * kw, cout, cin)
    top = jnp.concatenate([w_taps, jnp.zeros((kh * kw, cout, 1), jnp.float32)], axis=2)
    bot = jnp.concatenate([jnp.zeros((kh * kw, 1, cin), jnp.float32),
                           jnp.ones((kh * kw, 1, 1), jnp.float32)], axis=2)
    w_aug = jnp.concatenate([top, bot], axis=1)
    b_col = bias.reshape(cout, 1)

    kernel = functools.partial(_pconv_kernel, kh=kh, kw=kw, wp=wp, cout=cout)

    out_b, nm_b = pl.pallas_call(
        kernel,
        grid=(nb,),
        in_specs=[
            pl.BlockSpec((None, c_aug, l_in), lambda i: (i, 0, 0)),
            pl.BlockSpec((kh * kw, cout + 1, c_aug), lambda i: (0, 0, 0)),
            pl.BlockSpec((cout, 1), lambda i: (0, 0)),
        ],
        out_specs=(
            pl.BlockSpec((None, cout, l_out), lambda i: (i, 0, 0)),
            pl.BlockSpec((None, 1, l_out), lambda i: (i, 0, 0)),
        ),
        out_shape=(
            jax.ShapeDtypeStruct((nb, cout, l_out), jnp.float32),
            jax.ShapeDtypeStruct((nb, 1, l_out), jnp.float32),
        ),
        scratch_shapes=[pltpu.VMEM((cout + 1, l_out), jnp.float32)],
        compiler_params=pltpu.CompilerParams(
            dimension_semantics=("parallel",),
            vmem_limit_bytes=48 * 1024 * 1024,
        ),
    )(bands, w_aug, b_col)

    # (NB, Cout, r_b*Wp) -> dense (N, Cout, n_bands*r_b, Wp); keep only valid /
    # strided positions (garbage dense rows/cols are discarded here).
    out_d = jnp.moveaxis(out_b.reshape(n, n_bands, cout, r_b, wp), 2, 1)
    out_d = out_d.reshape(n, cout, n_bands * r_b, wp)
    nm_d = jnp.moveaxis(nm_b.reshape(n, n_bands, 1, r_b, wp), 2, 1)
    nm_d = nm_d.reshape(n, 1, n_bands * r_b, wp)

    row_end = (ho - 1) * stride + 1
    col_end = (wo - 1) * stride + 1
    out = out_d[:, :, :row_end:stride, :col_end:stride]
    nm = nm_d[:, :, :row_end:stride, :col_end:stride]
    new_mask = jnp.broadcast_to(nm, (n, cout, ho, wo))
    return out, new_mask


def _reference(x, m, w, b, stride, padding):
    """Pure-JAX reference mirroring the PyTorch module."""
    dn = jax.lax.conv_dimension_numbers(x.shape, w.shape, ("NCHW", "OIHW", "NCHW"))
    conv = lambda inp, wt: jax.lax.conv_general_dilated(
        inp, wt, (stride, stride), [(padding, padding)] * 2, dimension_numbers=dn)
    out = conv(x * m, w) + b.reshape(1, -1, 1, 1)
    out_mask = conv(m, jnp.ones_like(w))
    holes = out_mask == 0
    mask_sum = jnp.where(holes, 1.0, out_mask)
    bias_b = jnp.broadcast_to(b.reshape(1, -1, 1, 1), out.shape)
    out_pre = (out - bias_b) / mask_sum + bias_b
    out_final = jnp.where(holes, 0.0, out_pre)
    new_mask = jnp.where(holes, 0.0, 1.0)
    return out_final, new_mask


if __name__ == "__main__":
    # Module config: in_channels=4, out_channels=8, kernel_size=3, stride=1, padding=1
    N, Cin, H, W = 2, 4, 16, 16
    Cout, K, STRIDE, PAD = 8, 3, 1, 1

    key = jax.random.PRNGKey(0)
    kx, km, kw_, kb = jax.random.split(key, 4)

    x = jax.random.normal(kx, (N, Cin, H, W), jnp.float32)
    # Binary mask with some holes (0/1), as partial conv expects.
    mask = (jax.random.uniform(km, (N, Cin, H, W)) > 0.4).astype(jnp.float32)

    weight = jax.random.normal(kw_, (Cout, Cin, K, K), jnp.float32) * 0.1
    bias = jax.random.normal(kb, (Cout,), jnp.float32) * 0.1

    out, new_mask = partial_conv2d(x, mask, weight, bias, stride=STRIDE, padding=PAD)
    out, new_mask = jax.block_until_ready((out, new_mask))

    ref_out, ref_mask = _reference(x, mask, weight, bias, STRIDE, PAD)
    np.testing.assert_allclose(np.asarray(out), np.asarray(ref_out), rtol=1e-4, atol=1e-4)
    np.testing.assert_allclose(np.asarray(new_mask), np.asarray(ref_mask), rtol=0, atol=0)

    print("KERNEL_OK")
</pallas_src>

<mosaic_0001>
module attributes {stable_mosaic.version = 11 : i64} {
  func.func @_pconv_kernel(%arg0: i32, %arg1: memref<1x5x198xf32, #tpu.memory_space<vmem>>, %arg2: memref<9x9x5xf32, #tpu.memory_space<vmem>>, %arg3: memref<8x1xf32, #tpu.memory_space<vmem>>, %arg4: memref<1x8x144xf32, #tpu.memory_space<vmem>>, %arg5: memref<1x1x144xf32, #tpu.memory_space<vmem>>, %arg6: memref<9x144xf32, #tpu.memory_space<vmem>>) attributes {dimension_semantics = [#tpu.dimension_semantics<parallel>], iteration_bounds = array<i64: 4>, scalar_prefetch = 0 : i64, scratch_operands = 1 : i64, tpu.core_type = #tpu.core_type<tc>, window_params = [{transform_indices = @transform_0, window_bounds = array<i64: 1, 5, 198>}, {pipeline_mode = #tpu.pipeline_mode<synchronous>, transform_indices = @transform_1, window_bounds = array<i64: 9, 9, 5>}, {pipeline_mode = #tpu.pipeline_mode<synchronous>, transform_indices = @transform_2, window_bounds = array<i64: 8, 1>}, {transform_indices = @transform_3, window_bounds = array<i64: 1, 8, 144>}, {transform_indices = @transform_4, window_bounds = array<i64: 1, 1, 144>}]} {
    %c0 = arith.constant 0 : index
    %c0_0 = arith.constant 0 : index
    %c0_1 = arith.constant 0 : index
    %0 = vector.load %arg2[%c0, %c0_0, %c0_1] : memref<9x9x5xf32, #tpu.memory_space<vmem>>, vector<1x9x5xf32>
    %1 = vector.shape_cast %0 : vector<1x9x5xf32> to vector<9x5xf32>
    %c0_2 = arith.constant 0 : index
    %c0_3 = arith.constant 0 : index
    %c0_4 = arith.constant 0 : index
    %2 = vector.load %arg1[%c0_2, %c0_3, %c0_4] : memref<1x5x198xf32, #tpu.memory_space<vmem>>, vector<1x5x144xf32>
    %3 = vector.shape_cast %2 : vector<1x5x144xf32> to vector<5x144xf32>
    %cst = arith.constant dense<0.000000e+00> : vector<9x144xf32>
    %4 = tpu.matmul %1, %3, %cst {dimension_numbers = #tpu.dot_dimension_numbers<[1], [0], [0], [1], [0, 0, 1, 1], [], []>} : vector<9x5xf32>, vector<5x144xf32>, vector<9x144xf32> -> vector<9x144xf32>
    %c0_5 = arith.constant 0 : index
    %c0_6 = arith.constant 0 : index
    %5 = vector.load %arg6[%c0_5, %c0_6] : memref<9x144xf32, #tpu.memory_space<vmem>>, vector<9x144xf32>
    tpu.vector_store %arg6[%c0_5, %c0_6], %4 {strides = array<i32>} : memref<9x144xf32, #tpu.memory_space<vmem>>, vector<9x144xf32>,
    %c0_7 = arith.constant 0 : index
    %c0_8 = arith.constant 0 : index
    %6 = vector.load %arg6[%c0_7, %c0_8] : memref<9x144xf32, #tpu.memory_space<vmem>>, vector<9x144xf32>
    %c1 = arith.constant 1 : index
    %c0_9 = arith.constant 0 : index
    %c0_10 = arith.constant 0 : index
    %7 = vector.load %arg2[%c1, %c0_9, %c0_10] : memref<9x9x5xf32, #tpu.memory_space<vmem>>, vector<1x9x5xf32>
    %8 = vector.shape_cast %7 : vector<1x9x5xf32> to vector<9x5xf32>
    %c0_11 = arith.constant 0 : index
    %c0_12 = arith.constant 0 : index
    %c1_13 = arith.constant 1 : index
    %9 = vector.load %arg1[%c0_11, %c0_12, %c1_13] : memref<1x5x198xf32, #tpu.memory_space<vmem>>, vector<1x5x144xf32>
    %10 = vector.shape_cast %9 : vector<1x5x144xf32> to vector<5x144xf32>
    %cst_14 = arith.constant dense<0.000000e+00> : vector<9x144xf32>
    %11 = tpu.matmul %8, %10, %cst_14 {dimension_numbers = #tpu.dot_dimension_numbers<[1], [0], [0], [1], [0, 0, 1, 1], [], []>} : vector<9x5xf32>, vector<5x144xf32>, vector<9x144xf32> -> vector<9x144xf32>
    %12 = arith.addf %6, %11 : vector<9x144xf32>
    %c0_15 = arith.constant 0 : index
    %c0_16 = arith.constant 0 : index
    %13 = vector.load %arg6[%c0_15, %c0_16] : memref<9x144xf32, #tpu.memory_space<vmem>>, vector<9x144xf32>
    tpu.vector_store %arg6[%c0_15, %c0_16], %12 {strides = array<i32>} : memref<9x144xf32, #tpu.memory_space<vmem>>, vector<9x144xf32>,
    %c0_17 = arith.constant 0 : index
    %c0_18 = arith.constant 0 : index
    %14 = vector.load %arg6[%c0_17, %c0_18] : memref<9x144xf32, #tpu.memory_space<vmem>>, vector<9x144xf32>
    %c2 = arith.constant 2 : index
    %c0_19 = arith.constant 0 : index
    %c0_20 = arith.constant 0 : index
    %15 = vector.load %arg2[%c2, %c0_19, %c0_20] : memref<9x9x5xf32, #tpu.memory_space<vmem>>, vector<1x9x5xf32>
    %16 = vector.shape_cast %15 : vector<1x9x5xf32> to vector<9x5xf32>
    %c0_21 = arith.constant 0 : index
    %c0_22 = arith.constant 0 : index
    %c2_23 = arith.constant 2 : index
    %17 = vector.load %arg1[%c0_21, %c0_22, %c2_23] : memref<1x5x198xf32, #tpu.memory_space<vmem>>, vector<1x5x144xf32>
    %18 = vector.shape_cast %17 : vector<1x5x144xf32> to vector<5x144xf32>
    %cst_24 = arith.constant dense<0.000000e+00> : vector<9x144xf32>
    %19 = tpu.matmul %16, %18, %cst_24 {dimension_numbers = #tpu.dot_dimension_numbers<[1], [0], [0], [1], [0, 0, 1, 1], [], []>} : vector<9x5xf32>, vector<5x144xf32>, vector<9x144xf32> -> vector<9x144xf32>
    %20 = arith.addf %14, %19 : vector<9x144xf32>
    %c0_25 = arith.constant 0 : index
    %c0_26 = arith.constant 0 : index
    %21 = vector.load %arg6[%c0_25, %c0_26] : memref<9x144xf32, #tpu.memory_space<vmem>>, vector<9x144xf32>
    tpu.vector_store %arg6[%c0_25, %c0_26], %20 {strides = array<i32>} : memref<9x144xf32, #tpu.memory_space<vmem>>, vector<9x144xf32>,
    %c0_27 = arith.constant 0 : index
    %c0_28 = arith.constant 0 : index
    %22 = vector.load %arg6[%c0_27, %c0_28] : memref<9x144xf32, #tpu.memory_space<vmem>>, vector<9x144xf32>
    %c3 = arith.constant 3 : index
    %c0_29 = arith.constant 0 : index
    %c0_30 = arith.constant 0 : index
    %23 = vector.load %arg2[%c3, %c0_29, %c0_30] : memref<9x9x5xf32, #tpu.memory_space<vmem>>, vector<1x9x5xf32>
    %24 = vector.shape_cast %23 : vector<1x9x5xf32> to vector<9x5xf32>
    %c0_31 = arith.constant 0 : index
    %c0_32 = arith.constant 0 : index
    %c18 = arith.constant 18 : index
    %25 = vector.load %arg1[%c0_31, %c0_32, %c18] : memref<1x5x198xf32, #tpu.memory_space<vmem>>, vector<1x5x144xf32>
    %26 = vector.shape_cast %25 : vector<1x5x144xf32> to vector<5x144xf32>
    %cst_33 = arith.constant dense<0.000000e+00> : vector<9x144xf32>
    %27 = tpu.matmul %24, %26, %cst_33 {dimension_numbers = #tpu.dot_dimension_numbers<[1], [0], [0], [1], [0, 0, 1, 1], [], []>} : vector<9x5xf32>, vector<5x144xf32>, vector<9x144xf32> -> vector<9x144xf32>
    %28 = arith.addf %22, %27 : vector<9x144xf32>
    %c0_34 = arith.constant 0 : index
    %c0_35 = arith.constant 0 : index
    %29 = vector.load %arg6[%c0_34, %c0_35] : memref<9x144xf32, #tpu.memory_space<vmem>>, vector<9x144xf32>
    tpu.vector_store %arg6[%c0_34, %c0_35], %28 {strides = array<i32>} : memref<9x144xf32, #tpu.memory_space<vmem>>, vector<9x144xf32>,
    %c0_36 = arith.constant 0 : index
    %c0_37 = arith.constant 0 : index
    %30 = vector.load %arg6[%c0_36, %c0_37] : memref<9x144xf32, #tpu.memory_space<vmem>>, vector<9x144xf32>
    %c4 = arith.constant 4 : index
    %c0_38 = arith.constant 0 : index
    %c0_39 = arith.constant 0 : index
    %31 = vector.load %arg2[%c4, %c0_38, %c0_39] : memref<9x9x5xf32, #tpu.memory_space<vmem>>, vector<1x9x5xf32>
    %32 = vector.shape_cast %31 : vector<1x9x5xf32> to vector<9x5xf32>
    %c0_40 = arith.constant 0 : index
    %c0_41 = arith.constant 0 : index
    %c19 = arith.constant 19 : index
    %33 = vector.load %arg1[%c0_40, %c0_41, %c19] : memref<1x5x198xf32, #tpu.memory_space<vmem>>, vector<1x5x144xf32>
    %34 = vector.shape_cast %33 : vector<1x5x144xf32> to vector<5x144xf32>
    %cst_42 = arith.constant dense<0.000000e+00> : vector<9x144xf32>
    %35 = tpu.matmul %32, %34, %cst_42 {dimension_numbers = #tpu.dot_dimension_numbers<[1], [0], [0], [1], [0, 0, 1, 1], [], []>} : vector<9x5xf32>, vector<5x144xf32>, vector<9x144xf32> -> vector<9x144xf32>
    %36 = arith.addf %30, %35 : vector<9x144xf32>
    %c0_43 = arith.constant 0 : index
    %c0_44 = arith.constant 0 : index
    %37 = vector.load %arg6[%c0_43, %c0_44] : memref<9x144xf32, #tpu.memory_space<vmem>>, vector<9x144xf32>
    tpu.vector_store %arg6[%c0_43, %c0_44], %36 {strides = array<i32>} : memref<9x144xf32, #tpu.memory_space<vmem>>, vector<9x144xf32>,
    %c0_45 = arith.constant 0 : index
    %c0_46 = arith.constant 0 : index
    %38 = vector.load %arg6[%c0_45, %c0_46] : memref<9x144xf32, #tpu.memory_space<vmem>>, vector<9x144xf32>
    %c5 = arith.constant 5 : index
    %c0_47 = arith.constant 0 : index
    %c0_48 = arith.constant 0 : index
    %39 = vector.load %arg2[%c5, %c0_47, %c0_48] : memref<9x9x5xf32, #tpu.memory_space<vmem>>, vector<1x9x5xf32>
    %40 = vector.shape_cast %39 : vector<1x9x5xf32> to vector<9x5xf32>
    %c0_49 = arith.constant 0 : index
    %c0_50 = arith.constant 0 : index
    %c20 = arith.constant 20 : index
    %41 = vector.load %arg1[%c0_49, %c0_50, %c20] : memref<1x5x198xf32, #tpu.memory_space<vmem>>, vector<1x5x144xf32>
    %42 = vector.shape_cast %41 : vector<1x5x144xf32> to vector<5x144xf32>
    %cst_51 = arith.constant dense<0.000000e+00> : vector<9x144xf32>
    %43 = tpu.matmul %40, %42, %cst_51 {dimension_numbers = #tpu.dot_dimension_numbers<[1], [0], [0], [1], [0, 0, 1, 1], [], []>} : vector<9x5xf32>, vector<5x144xf32>, vector<9x144xf32> -> vector<9x144xf32>
    %44 = arith.addf %38, %43 : vector<9x144xf32>
    %c0_52 = arith.constant 0 : index
    %c0_53 = arith.constant 0 : index
    %45 = vector.load %arg6[%c0_52, %c0_53] : memref<9x144xf32, #tpu.memory_space<vmem>>, vector<9x144xf32>
    tpu.vector_store %arg6[%c0_52, %c0_53], %44 {strides = array<i32>} : memref<9x144xf32, #tpu.memory_space<vmem>>, vector<9x144xf32>,
    %c0_54 = arith.constant 0 : index
    %c0_55 = arith.constant 0 : index
    %46 = vector.load %arg6[%c0_54, %c0_55] : memref<9x144xf32, #tpu.memory_space<vmem>>, vector<9x144xf32>
    %c6 = arith.constant 6 : index
    %c0_56 = arith.constant 0 : index
    %c0_57 = arith.constant 0 : index
    %47 = vector.load %arg2[%c6, %c0_56, %c0_57] : memref<9x9x5xf32, #tpu.memory_space<vmem>>, vector<1x9x5xf32>
    %48 = vector.shape_cast %47 : vector<1x9x5xf32> to vector<9x5xf32>
    %c0_58 = arith.constant 0 : index
    %c0_59 = arith.constant 0 : index
    %c36 = arith.constant 36 : index
    %49 = vector.load %arg1[%c0_58, %c0_59, %c36] : memref<1x5x198xf32, #tpu.memory_space<vmem>>, vector<1x5x144xf32>
    %50 = vector.shape_cast %49 : vector<1x5x144xf32> to vector<5x144xf32>
    %cst_60 = arith.constant dense<0.000000e+00> : vector<9x144xf32>
    %51 = tpu.matmul %48, %50, %cst_60 {dimension_numbers = #tpu.dot_dimension_numbers<[1], [0], [0], [1], [0, 0, 1, 1], [], []>} : vector<9x5xf32>, vector<5x144xf32>, vector<9x144xf32> -> vector<9x144xf32>
    %52 = arith.addf %46, %51 : vector<9x144xf32>
    %c0_61 = arith.constant 0 : index
    %c0_62 = arith.constant 0 : index
    %53 = vector.load %arg6[%c0_61, %c0_62] : memref<9x144xf32, #tpu.memory_space<vmem>>, vector<9x144xf32>
    tpu.vector_store %arg6[%c0_61, %c0_62], %52 {strides = array<i32>} : memref<9x144xf32, #tpu.memory_space<vmem>>, vector<9x144xf32>,
    %c0_63 = arith.constant 0 : index
    %c0_64 = arith.constant 0 : index
    %54 = vector.load %arg6[%c0_63, %c0_64] : memref<9x144xf32, #tpu.memory_space<vmem>>, vector<9x144xf32>
    %c7 = arith.constant 7 : index
    %c0_65 = arith.constant 0 : index
    %c0_66 = arith.constant 0 : index
    %55 = vector.load %arg2[%c7, %c0_65, %c0_66] : memref<9x9x5xf32, #tpu.memory_space<vmem>>, vector<1x9x5xf32>
    %56 = vector.shape_cast %55 : vector<1x9x5xf32> to vector<9x5xf32>
    %c0_67 = arith.constant 0 : index
    %c0_68 = arith.constant 0 : index
    %c37 = arith.constant 37 : index
    %57 = vector.load %arg1[%c0_67, %c0_68, %c37] : memref<1x5x198xf32, #tpu.memory_space<vmem>>, vector<1x5x144xf32>
    %58 = vector.shape_cast %57 : vector<1x5x144xf32> to vector<5x144xf32>
    %cst_69 = arith.constant dense<0.000000e+00> : vector<9x144xf32>
    %59 = tpu.matmul %56, %58, %cst_69 {dimension_numbers = #tpu.dot_dimension_numbers<[1], [0], [0], [1], [0, 0, 1, 1], [], []>} : vector<9x5xf32>, vector<5x144xf32>, vector<9x144xf32> -> vector<9x144xf32>
    %60 = arith.addf %54, %59 : vector<9x144xf32>
    %c0_70 = arith.constant 0 : index
    %c0_71 = arith.constant 0 : index
    %61 = vector.load %arg6[%c0_70, %c0_71] : memref<9x144xf32, #tpu.memory_space<vmem>>, vector<9x144xf32>
    tpu.vector_store %arg6[%c0_70, %c0_71], %60 {strides = array<i32>} : memref<9x144xf32, #tpu.memory_space<vmem>>, vector<9x144xf32>,
    %c0_72 = arith.constant 0 : index
    %c0_73 = arith.constant 0 : index
    %62 = vector.load %arg6[%c0_72, %c0_73] : memref<9x144xf32, #tpu.memory_space<vmem>>, vector<9x144xf32>
    %c8 = arith.constant 8 : index
    %c0_74 = arith.constant 0 : index
    %c0_75 = arith.constant 0 : index
    %63 = vector.load %arg2[%c8, %c0_74, %c0_75] : memref<9x9x5xf32, #tpu.memory_space<vmem>>, vector<1x9x5xf32>
    %64 = vector.shape_cast %63 : vector<1x9x5xf32> to vector<9x5xf32>
    %c0_76 = arith.constant 0 : index
    %c0_77 = arith.constant 0 : index
    %c38 = arith.constant 38 : index
    %65 = vector.load %arg1[%c0_76, %c0_77, %c38] : memref<1x5x198xf32, #tpu.memory_space<vmem>>, vector<1x5x144xf32>
    %66 = vector.shape_cast %65 : vector<1x5x144xf32> to vector<5x144xf32>
    %cst_78 = arith.constant dense<0.000000e+00> : vector<9x144xf32>
    %67 = tpu.matmul %64, %66, %cst_78 {dimension_numbers = #tpu.dot_dimension_numbers<[1], [0], [0], [1], [0, 0, 1, 1], [], []>} : vector<9x5xf32>, vector<5x144xf32>, vector<9x144xf32> -> vector<9x144xf32>
    %68 = arith.addf %62, %67 : vector<9x144xf32>
    %c0_79 = arith.constant 0 : index
    %c0_80 = arith.constant 0 : index
    %69 = vector.load %arg6[%c0_79, %c0_80] : memref<9x144xf32, #tpu.memory_space<vmem>>, vector<9x144xf32>
    tpu.vector_store %arg6[%c0_79, %c0_80], %68 {strides = array<i32>} : memref<9x144xf32, #tpu.memory_space<vmem>>, vector<9x144xf32>,
    %c0_81 = arith.constant 0 : index
    %c0_82 = arith.constant 0 : index
    %70 = vector.load %arg6[%c0_81, %c0_82] : memref<9x144xf32, #tpu.memory_space<vmem>>, vector<9x144xf32>
    %71 = vector.extract_strided_slice %70 {offsets = [0, 0], sizes = [8, 144], strides = [1, 1]} : vector<9x144xf32> to vector<8x144xf32>
    %72 = vector.extract_strided_slice %70 {offsets = [8, 0], sizes = [1, 144], strides = [1, 1]} : vector<9x144xf32> to vector<1x144xf32>
    %cst_83 = arith.constant 0.000000e+00 : f32
    %73 = vector.broadcast %cst_83 : f32 to vector<1x144xf32>
    %74 = arith.cmpf oeq, %72, %73 : vector<1x144xf32>
    %cst_84 = arith.constant 1.000000e+00 : f32
    %75 = vector.broadcast %cst_84 : f32 to vector<1x144xf32>
    %76 = arith.select %74, %75, %72 : vector<1x144xi1>, vector<1x144xf32>
    %77 = tpu.reciprocal %76 : vector<1x144xf32> -> vector<1x144xf32>
    %78 = vector.broadcast %77 : vector<1x144xf32> to vector<8x144xf32>
    %79 = arith.mulf %71, %78 : vector<8x144xf32>
    %c0_85 = arith.constant 0 : index
    %c0_86 = arith.constant 0 : index
    %80 = vector.load %arg3[%c0_85, %c0_86] : memref<8x1xf32, #tpu.memory_space<vmem>>, vector<8x1xf32>
    %81 = vector.broadcast %80 : vector<8x1xf32> to vector<8x144xf32>
    %82 = arith.addf %79, %81 : vector<8x144xf32>
    %cst_87 = arith.constant 0.000000e+00 : f32
    %83 = vector.shape_cast %74 : vector<1x144xi1> to vector<1x144xi1>
    %84 = vector.broadcast %83 : vector<1x144xi1> to vector<8x144xi1>
    %85 = vector.broadcast %cst_87 : f32 to vector<8x144xf32>
    %86 = arith.select %84, %85, %82 : vector<8x144xi1>, vector<8x144xf32>
    %c0_88 = arith.constant 0 : index
    %c0_89 = arith.constant 0 : index
    %c0_90 = arith.constant 0 : index
    %87 = vector.load %arg4[%c0_88, %c0_89, %c0_90] : memref<1x8x144xf32, #tpu.memory_space<vmem>>, vector<1x8x144xf32>
    %88 = vector.shape_cast %87 : vector<1x8x144xf32> to vector<8x144xf32>
    %89 = vector.shape_cast %86 : vector<8x144xf32> to vector<1x8x144xf32>
    tpu.vector_store %arg4[%c0_88, %c0_89, %c0_90], %89 {strides = array<i32>} : memref<1x8x144xf32, #tpu.memory_space<vmem>>, vector<1x8x144xf32>,
    %cst_91 = arith.constant 0.000000e+00 : f32
    %cst_92 = arith.constant 1.000000e+00 : f32
    %90 = vector.broadcast %cst_91 : f32 to vector<1x144xf32>
    %91 = vector.broadcast %cst_92 : f32 to vector<1x144xf32>
    %92 = arith.select %74, %90, %91 : vector<1x144xi1>, vector<1x144xf32>
    %c0_93 = arith.constant 0 : index
    %c0_94 = arith.constant 0 : index
    %c0_95 = arith.constant 0 : index
    %93 = vector.load %arg5[%c0_93, %c0_94, %c0_95] : memref<1x1x144xf32, #tpu.memory_space<vmem>>, vector<1x1x144xf32>
    %94 = vector.shape_cast %93 : vector<1x1x144xf32> to vector<1x144xf32>
    %95 = vector.shape_cast %92 : vector<1x144xf32> to vector<1x1x144xf32>
    tpu.vector_store %arg5[%c0_93, %c0_94, %c0_95], %95 {strides = array<i32>} : memref<1x1x144xf32, #tpu.memory_space<vmem>>, vector<1x1x144xf32>,
    return
  }
  func.func @transform_0(%arg0: i32) -> (i32, i32, i32) {
    %c0_i32 = arith.constant 0 : i32
    %c0_i32_0 = arith.constant 0 : i32
    %c0_i32_1 = arith.constant 0 : i32
    return %arg0, %c0_i32, %c0_i32_0 : i32, i32, i32
  }
  func.func @transform_1(%arg0: i32) -> (i32, i32, i32) {
    %c0_i32 = arith.constant 0 : i32
    %c0_i32_0 = arith.constant 0 : i32
    %c0_i32_1 = arith.constant 0 : i32
    %c0_i32_2 = arith.constant 0 : i32
    return %c0_i32, %c0_i32_0, %c0_i32_1 : i32, i32, i32
  }
  func.func @transform_2(%arg0: i32) -> (i32, i32) {
    %c0_i32 = arith.constant 0 : i32
    %c0_i32_0 = arith.constant 0 : i32
    %c0_i32_1 = arith.constant 0 : i32
    return %c0_i32, %c0_i32_0 : i32, i32
  }
  func.func @transform_3(%arg0: i32) -> (i32, i32, i32) {
    %c0_i32 = arith.constant 0 : i32
    %c0_i32_0 = arith.constant 0 : i32
    %c0_i32_1 = arith.constant 0 : i32
    return %arg0, %c0_i32, %c0_i32_0 : i32, i32, i32
  }
  func.func @transform_4(%arg0: i32) -> (i32, i32, i32) {
    %c0_i32 = arith.constant 0 : i32
    %c0_i32_0 = arith.constant 0 : i32
    %c0_i32_1 = arith.constant 0 : i32
    return %arg0, %c0_i32, %c0_i32_0 : i32, i32, i32
  }
}

</mosaic_0001>

<llo_original>
// kernel: tpu_custom_call.1
$region0: #{tpu_custom_call.1}
  #allocation0 [shape = 'u32[]', space=smem, size = 0x4, offset = 0x4, fixed_abs, tag = 'smem constant byte address 0x4 - core index']
  #allocation1 [shape = 'u32[144,128]{1,0:T(1,128)}', space=vmem, size = 0x12000, scoped, tag = 'internal scratch']
  #allocation2 [shape = 'f32[9,144]{1,0:T(8,128)}', space=vmem, size = 0x4000, scoped, tag = 'scratch operand']
  %s0 = inlined_call_operand.vmem [shape: f32[4,5,198], index: 0, kind: input, shape index: {}]
  %s1 = inlined_call_operand.vmem [shape: f32[9,9,5], index: 1, kind: input, shape index: {}]
  %s2 = inlined_call_operand.vmem [shape: f32[8,1], index: 2, kind: input, shape index: {}]
  %s3 = inlined_call_operand.hbm [shape: f32[4,8,144], index: 3, kind: output, shape index: {0}]
  %s4 = inlined_call_operand.hbm [shape: f32[4,1,144], index: 4, kind: output, shape index: {1}]
  %5 = xla_tuple %s3, %s4
  %s6 = sld [smem:[#allocation0]]
  $region53: #{tpu_custom_call.1} parent=0
    _
  %s8 = ssub.s32 1, %s6
  %s9 = scalar_select 0, %s8, %s6
  $region1: #{tpu_custom_call.1} parent=0
    #allocation3 [shape = 'u8[16384]{0}', space=vmem, size = 0x4000, scoped, tag = 'output window, operand 0']
    #allocation4 [shape = 's32[2]{0}', space=sflag, size = 0x8, scoped, tag = 'scoped memory for tpu_custom_call.1']
    #allocation5 [shape = 'u8[2048]{0}', space=vmem, size = 0x800, scoped, tag = 'output window, operand 1']
    #allocation6 [shape = 's32[2]{0}', space=sflag, size = 0x8, scoped, tag = 'scoped memory for tpu_custom_call.1']
    %10 = vsyncpa [#allocation4], 0
    %s11 = scalar_lea.sflag [#allocation4], 1
    %12 = vsyncpa %s11, 0
    %13 = vsyncpa [#allocation6], 0
    %s14 = scalar_lea.sflag [#allocation6], 1
    %15 = vsyncpa %s14, 0
    loop: start=0, step=1, limit=6
    $region2: #{tpu_custom_call.1} parent=1 // loop_pre_header
      _
    $region3: #{tpu_custom_call.1} parent=1 // loop_header
      %s17 = sphi 0, %s21
      %p18 = scmp.ge.s32.totalorder %s17, 6
      %s27 = sphi 0, %s29
      %s30 = sphi 0, %s27
      %s31 = sphi 0, %s30
      %s47 = sphi 0, %s31
      %s51 = sphi 0, %s51
      %s53 = sphi 0, %s51
      %s54 = sphi 0, %s53
      %s68 = sphi 0, %s54
      %s72 = sphi 0, %s72
      %s74 = sphi 0, %s72
      %s75 = sphi 0, %s74
      %s89 = sphi 0, %s75
      %s95 = sphi 0, %s97
      %s98 = sphi 0, %s95
      %s99 = sphi 0, %s98
      %s115 = sphi 0, %s99
      %s121 = sphi 0, %s123
      %s124 = sphi 0, %s121
      %s125 = sphi 0, %s124
      %s141 = sphi 0, %s125
    $region4: #{tpu_custom_call.1} parent=1 // loop_header_branch
      %20 = sbr.rel (%p18) target = $region8
    $region5: #{tpu_custom_call.1} parent=1 // loop_body
      %s22 = ssub.s32 %s17, 1
      %s23 = ssub.s32 %s17, 2
      %s24 = sadd.s32 %s17, 1
      %s25 = ssub.s32 %s17, %s24
      %p26 = scmp.eq.s32.totalorder %s25, 0
      %s28 = sadd.s32 %s27, 1
      %s29 = scalar_select %p26, %s27, %s28
      %p32 = pneg %p26
      %p33 = scmp.eq.s32.totalorder %s17, 3
      %p34 = por %p32, %p33
      %p35 = scmp.ne.s32.totalorder %s27, %s30
      %p36 = scmp.eq.s32.totalorder %s17, 0
      %p37 = por %p35, %p36
      %p38 = scmp.ne.s32.totalorder %s27, %s30
      %p39 = scmp.eq.s32.totalorder %s22, 3
      %p40 = por %p38, %p39
      %p41 = scmp.ne.s32.totalorder %s30, %s31
      %p42 = scmp.eq.s32.totalorder %s22, 0
      %p43 = por %p41, %p42
      %p44 = scmp.ne.s32.totalorder %s30, %s31
      %p45 = scmp.eq.s32.totalorder %s23, 3
      %p46 = por %p44, %p45
      %p48 = scmp.ne.s32.totalorder %s31, %s47
      %p49 = scmp.eq.s32.totalorder %s23, 0
      %p50 = por %p48, %p49
      %s52 = sadd.s32 %s51, 1
      %p55 = scmp.eq.s32.totalorder %s17, 3
      %p56 = scmp.ne.s32.totalorder %s51, %s53
      %p57 = scmp.eq.s32.totalorder %s17, 0
      %p58 = por %p56, %p57
      %p59 = scmp.ne.s32.totalorder %s51, %s53
      %p60 = scmp.eq.s32.totalorder %s22, 3
      %p61 = por %p59, %p60
      %p62 = scmp.ne.s32.totalorder %s53, %s54
      %p63 = scmp.eq.s32.totalorder %s22, 0
      %p64 = por %p62, %p63
      %p65 = scmp.ne.s32.totalorder %s53, %s54
      %p66 = scmp.eq.s32.totalorder %s23, 3
      %p67 = por %p65, %p66
      %p69 = scmp.ne.s32.totalorder %s54, %s68
      %p70 = scmp.eq.s32.totalorder %s23, 0
      %p71 = por %p69, %p70
      %s73 = sadd.s32 %s72, 1
      %p76 = scmp.eq.s32.totalorder %s17, 3
      %p77 = scmp.ne.s32.totalorder %s72, %s74
      %p78 = scmp.eq.s32.totalorder %s17, 0
      %p79 = por %p77, %p78
      %p80 = scmp.ne.s32.totalorder %s72, %s74
      %p81 = scmp.eq.s32.totalorder %s22, 3
      %p82 = por %p80, %p81
      %p83 = scmp.ne.s32.totalorder %s74, %s75
      %p84 = scmp.eq.s32.totalorder %s22, 0
      %p85 = por %p83, %p84
      %p86 = scmp.ne.s32.totalorder %s74, %s75
      %p87 = scmp.eq.s32.totalorder %s23, 3
      %p88 = por %p86, %p87
      %p90 = scmp.ne.s32.totalorder %s75, %s89
      %p91 = scmp.eq.s32.totalorder %s23, 0
      %p92 = por %p90, %p91
      %s93 = ssub.s32 %s17, %s24
      %p94 = scmp.eq.s32.totalorder %s93, 0
      %s96 = sadd.s32 %s95, 1
      %s97 = scalar_select %p94, %s95, %s96
      %p100 = pneg %p94
      %p101 = scmp.eq.s32.totalorder %s17, 3
      %p102 = por %p100, %p101
      %p103 = scmp.ne.s32.totalorder %s95, %s98
      %p104 = scmp.eq.s32.totalorder %s17, 0
      %p105 = por %p103, %p104
      %p106 = scmp.ne.s32.totalorder %s95, %s98
      %p107 = scmp.eq.s32.totalorder %s22, 3
      %p108 = por %p106, %p107
      %p109 = scmp.ne.s32.totalorder %s98, %s99
      %p110 = scmp.eq.s32.totalorder %s22, 0
      %p111 = por %p109, %p110
      %p112 = scmp.ne.s32.totalorder %s98, %s99
      %p113 = scmp.eq.s32.totalorder %s23, 3
      %p114 = por %p112, %p113
      %p116 = scmp.ne.s32.totalorder %s99, %s115
      %p117 = scmp.eq.s32.totalorder %s23, 0
      %p118 = por %p116, %p117
      %s119 = ssub.s32 %s17, %s24
      %p120 = scmp.eq.s32.totalorder %s119, 0
      %s122 = sadd.s32 %s121, 1
      %s123 = scalar_select %p120, %s121, %s122
      %p126 = pneg %p120
      %p127 = scmp.eq.s32.totalorder %s17, 3
      %p128 = por %p126, %p127
      %p129 = scmp.ne.s32.totalorder %s121, %s124
      %p130 = scmp.eq.s32.totalorder %s17, 0
      %p131 = por %p129, %p130
      %p132 = scmp.ne.s32.totalorder %s121, %s124
      %p133 = scmp.eq.s32.totalorder %s22, 3
      %p134 = por %p132, %p133
      %p135 = scmp.ne.s32.totalorder %s124, %s125
      %p136 = scmp.eq.s32.totalorder %s22, 0
      %p137 = por %p135, %p136
      %p138 = scmp.ne.s32.totalorder %s124, %s125
      %p139 = scmp.eq.s32.totalorder %s23, 3
      %p140 = por %p138, %p139
      %p142 = scmp.ne.s32.totalorder %s125, %s141
      %p143 = scmp.eq.s32.totalorder %s23, 0
      %p144 = por %p142, %p143
      %p145 = scmp.le.s32.totalorder 1, %s17
      %p146 = scmp.lt.s32.totalorder %s17, 5
      %p147 = pnand %p145, %p146
      %p148 = pneg %p147
      // Predicated region
      $region9: #{tpu_custom_call.1} parent=5 // pred_check
        _
      $region10: #{tpu_custom_call.1} parent=5 // pred_check_branch
        %150 = sbr.rel (%p147) target = $region12
      $region11: #{tpu_custom_call.1} parent=5 // pred_region
        %s151 = ssub.s32 %s17, 1
        // Predicated region
        $region13: #{tpu_custom_call.1} parent=11 // pred_check
          %p152 = pneg %p64
        $region14: #{tpu_custom_call.1} parent=11 // pred_check_branch
          %154 = sbr.rel (%p152) target = $region16
        $region15: #{tpu_custom_call.1} parent=11 // pred_region
          _
        $region16: #{tpu_custom_call.1} parent=11 // pred_fallthru
          _
        // Predicated region
        $region17: #{tpu_custom_call.1} parent=11 // pred_check
          %p155 = pneg %p85
        $region18: #{tpu_custom_call.1} parent=11 // pred_check_branch
          %157 = sbr.rel (%p155) target = $region20
        $region19: #{tpu_custom_call.1} parent=11 // pred_region
          _
        $region20: #{tpu_custom_call.1} parent=11 // pred_fallthru
          _
      $region12: #{tpu_custom_call.1} parent=5 // pred_fallthru
        _
      %p158 = scmp.lt.s32.totalorder %s17, 4
      // Predicated region
      $region21: #{tpu_custom_call.1} parent=5 // pred_check
        %p159 = pneg %p158
      $region22: #{tpu_custom_call.1} parent=5 // pred_check_branch
        %161 = sbr.rel (%p159) target = $region24
      $region23: #{tpu_custom_call.1} parent=5 // pred_region
        // Predicated region
        $region25: #{tpu_custom_call.1} parent=23 // pred_check
          %p162 = pneg %p37
        $region26: #{tpu_custom_call.1} parent=23 // pred_check_branch
          %164 = sbr.rel (%p162) target = $region28
        $region27: #{tpu_custom_call.1} parent=23 // pred_region
          %p165 = scmp.lt.s32.totalorder %s17, 3
          %s166 = scalar_select %p165, %s17, 3
          %s167 = smul.addr %s166, 2
          %s168 = smul.addr %s167, 8
          %s169 = scalar_lea.vmem %s0, %s168
        $region28: #{tpu_custom_call.1} parent=23 // pred_fallthru
          _
      $region24: #{tpu_custom_call.1} parent=5 // pred_fallthru
        _
      %p170 = scmp.le.s32.totalorder 1, %s17
      %p171 = scmp.lt.s32.totalorder %s17, 5
      %p172 = pnand %p170, %p171
      %p173 = pneg %p172
      // Predicated region
      $region29: #{tpu_custom_call.1} parent=5 // pred_check
        _
      $region30: #{tpu_custom_call.1} parent=5 // pred_check_branch
        %175 = sbr.rel (%p172) target = $region32
      $region31: #{tpu_custom_call.1} parent=5 // pred_region
        %s176 = ssub.s32 %s17, 1
        %p177 = scmp.lt.s32.totalorder %s22, 3
        %s178 = scalar_select %p177, %s22, 3
        %s179 = smul.addr %s178, 2
        %s180 = smul.addr %s179, 8
        %s181 = scalar_lea.vmem %s0, %s180
        %p182 = pneg %p43
        %p183 = pneg %p40
        %p184 = pneg %p64
        %p185 = pneg %p61
        %p186 = pneg %p85
        %p187 = pneg %p82
        %p188 = pneg %p111
        %p189 = pneg %p108
        %s190 = sand.u32 %s98, 1
        %s191 = scalar_lea.sflag [#allocation4], %s190
        %s192 = sand.u32 %s98, 1
        %s193 = smul.addr %s192, 16
        %s194 = scalar_lea.vmem [#allocation3], %s193
        %p195 = pneg %p137
        %p196 = pneg %p134
        %s197 = sand.u32 %s124, 1
        %s198 = scalar_lea.sflag [#allocation6], %s197
        %s199 = sand.u32 %s124, 1
        %s200 = smul.addr %s199, 2
        %s201 = scalar_lea.vmem [#allocation5], %s200
        %p202 = scmp.lt.s32.totalorder %s22, 3
        %s203 = scalar_select %p202, %s22, 3
        %s204 = smul.addr %s203, 2
        %s205 = smul.addr %s204, 8
        %s206 = scalar_lea.vmem %s0, %s205
        %v207 = vld [vmem:[%s1] sm:$0xff]
        %v208 = vld [vmem:[%s1 + $0x8] sm:$0x1]
        %v209 = vld [vmem:[%s206] sm:$0x1f]
        %v210 = vld [vmem:[%s206 + $0x8] sm:$0x1f]
        %vm211 = vcmask 39936
        %v213 = vsel %vm211, %v207, 0
        %v216 = vsel %vm211, %v208, 0
        %vm218 = vcmask 1044480
        %v220 = vsel %vm218, %v209, 0
        %v223 = vsel %vm218, %v210, 0
        %225 = vmatprep.subr.mxu0 %v223
        %226 = vmatpush1.msra.mxu0 %v220
        %227 = vmatprep.subr.mxu0 0.0
        %228 = vmatpush1.msra.mxu0 0.0
        %229 = vmatprep.subr.mxu0 0.0
        %230 = vmatpush1.msra.mxu0 0.0
        %231 = vmatprep.subr.mxu0 0.0
        %232 = vmatpush1.msra.mxu0 0.0
        %233 = vmatprep.subr.mxu0 0.0
        %234 = vmatpush1.msra.mxu0 0.0
        %235 = vmatprep.subr.mxu0 0.0
        %236 = vmatpush1.msra.mxu0 0.0
        %237 = vmatprep.subr.mxu0 0.0
        %238 = vmatpush1.msra.mxu0 0.0
        %239 = vmatprep.subr.mxu0 0.0
        %240 = vmatpush1.msra.mxu0 0.0
        %241 = vmatprep.subr.mxu0 0.0
        %242 = vmatpush1.msra.mxu0 0.0
        %243 = vmatprep.subr.mxu0 0.0
        %244 = vmatpush1.msra.mxu0 0.0
        %245 = vmatprep.subr.mxu0 0.0
        %246 = vmatpush1.msra.mxu0 0.0
        %247 = vmatprep.subr.mxu0 0.0
        %248 = vmatpush1.msra.mxu0 0.0
        %249 = vmatprep.subr.mxu0 0.0
        %250 = vmatpush1.msra.mxu0 0.0
        %251 = vmatprep.subr.mxu0 0.0
        %252 = vmatpush1.msra.mxu0 0.0
        %253 = vmatprep.subr.mxu0 0.0
        %254 = vmatpush1.msra.mxu0 0.0
        %255 = vmatprep.subr.mxu0 0.0
        %256 = vmatpush1.msra.mxu0 0.0
        %257 = vmatprep.subr.mxu0 0.0
        %258 = vmatpush1.msra.mxu0 0.0
        %259 = vmatprep.subr.mxu0 0.0
        %260 = vmatpush1.msra.mxu0 0.0
        %261 = vmatprep.subr.mxu0 0.0
        %262 = vmatpush1.msra.mxu0 0.0
        %263 = vmatprep.subr.mxu0 0.0
        %264 = vmatpush1.msra.mxu0 0.0
        %265 = vmatprep.subr.mxu0 0.0
        %266 = vmatpush1.msra.mxu0 0.0
        %267 = vmatprep.subr.mxu0 0.0
        %268 = vmatpush1.msra.mxu0 0.0
        %269 = vmatprep.subr.mxu0 0.0
        %270 = vmatpush1.msra.mxu0 0.0
        %271 = vmatprep.subr.mxu0 0.0
        %272 = vmatpush1.msra.mxu0 0.0
        %273 = vmatprep.subr.mxu0 0.0
        %274 = vmatpush1.msra.mxu0 0.0
        %275 = vmatprep.subr.mxu0 0.0
        %276 = vmatpush1.msra.mxu0 0.0
        %277 = vmatprep.subr.mxu0 0.0
        %278 = vmatpush1.msra.mxu0 0.0
        %279 = vmatprep.subr.mxu0 0.0
        %280 = vmatpush1.msra.mxu0 0.0
        %281 = vmatprep.subr.mxu0 0.0
        %282 = vmatpush1.msra.mxu0 0.0
        %283 = vmatprep.subr.mxu0 0.0
        %284 = vmatpush1.msra.mxu0 0.0
        %285 = vmatprep.subr.mxu0 0.0
        %286 = vmatpush1.msra.mxu0 0.0
        %287 = vmatprep.subr.mxu0 0.0
        %288 = vmatpush1.msra.mxu0 0.0
        %289 = vmatprep.mubr.f32.mxu0 0.0
        %290 = vmatmul.mubr.f32.gmra.mrb[0].mxu0 %v213
        %v291 = vpop.f32.mrb[0].mxu0
        %v292 = vadd.f32 0.0, %v291
        %v293 = vpop.f32.mrb[0].mxu0
        %v294 = vadd.f32 0.0, %v293
        %295 = vmatprep.mubr.f32.mxu0 0.0
        %296 = vmatmul.mubr.f32.gmra.mrb[0].mxu0 %v216
        %v297 = vpop.f32.mrb[0].mxu0
        %v298 = vadd.f32 0.0, %v297
        %v299 = vpop.f32.mrb[0].mxu0
        %v300 = vadd.f32 0.0, %v299
        %301 = vdwg.mxu0
        %302 = vst [vmem:[#allocation2] sm:$0xff] %v292
        %vm303 = vcmask 130048
        %304 = vst.msk [vmem:[#allocation2 + $0x8] sm:$0xff] %vm303, %v294
        %305 = vst [vmem:[#allocation2 + $0x10] sm:$0x1] %v298
        %vm306 = vcmask 122880
        %307 = vst.msk [vmem:[#allocation2 + $0x18] sm:$0x1] %vm306, %v300
        %v308 = vld [vmem:[#allocation2] sm:$0xff]
        %v309 = vld [vmem:[#allocation2 + $0x8] sm:$0xff]
        %v310 = vld [vmem:[#allocation2 + $0x10] sm:$0x1]
        %v311 = vld [vmem:[#allocation2 + $0x18] sm:$0x1]
        %s312 = scalar_lea.vmem %s1, 16
        %v313 = vld [vmem:[%s312] sm:$0xff]
        %v314 = vld [vmem:[%s312 + $0x8] sm:$0x1]
        %v315 = vld [vmem:[%s206] sm:$0x1f]
        %v316 = vld [vmem:[%s206 + $0x8] sm:$0x1f]
        %319 = vrot.lane.b32.xlu0 %v315, 127
        %v320 = vpop.permute.xlu0 %319
        %321 = vrot.lane.b32.xlu0 %v316, 127
        %v322 = vpop.permute.xlu0 %321
        %vm323 = vcmask 1039360
        %v324 = vsel %vm323, %v320, %v322
        %v326 = vsel %vm211, %v313, 0
        %v329 = vsel %vm211, %v314, 0
        %v331 = vsel %vm218, %v324, 0
        %v333 = vsel %vm218, %v322, 0
        %335 = vmatprep.subr.mxu0 %v333
        %336 = vmatpush1.msra.mxu0 %v331
        %337 = vmatprep.subr.mxu0 0.0
        %338 = vmatpush1.msra.mxu0 0.0
        %339 = vmatprep.subr.mxu0 0.0
        %340 = vmatpush1.msra.mxu0 0.0
        %341 = vmatprep.subr.mxu0 0.0
        %342 = vmatpush1.msra.mxu0 0.0
        %343 = vmatprep.subr.mxu0 0.0
        %344 = vmatpush1.msra.mxu0 0.0
        %345 = vmatprep.subr.mxu0 0.0
        %346 = vmatpush1.msra.mxu0 0.0
        %347 = vmatprep.subr.mxu0 0.0
        %348 = vmatpush1.msra.mxu0 0.0
        %349 = vmatprep.subr.mxu0 0.0
        %350 = vmatpush1.msra.mxu0 0.0
        %351 = vmatprep.subr.mxu0 0.0
        %352 = vmatpush1.msra.mxu0 0.0
        %353 = vmatprep.subr.mxu0 0.0
        %354 = vmatpush1.msra.mxu0 0.0
        %355 = vmatprep.subr.mxu0 0.0
        %356 = vmatpush1.msra.mxu0 0.0
        %357 = vmatprep.subr.mxu0 0.0
        %358 = vmatpush1.msra.mxu0 0.0
        %359 = vmatprep.subr.mxu0 0.0
        %360 = vmatpush1.msra.mxu0 0.0
        %361 = vmatprep.subr.mxu0 0.0
        %362 = vmatpush1.msra.mxu0 0.0
        %363 = vmatprep.subr.mxu0 0.0
        %364 = vmatpush1.msra.mxu0 0.0
        %365 = vmatprep.subr.mxu0 0.0
        %366 = vmatpush1.msra.mxu0 0.0
        %367 = vmatprep.subr.mxu0 0.0
        %368 = vmatpush1.msra.mxu0 0.0
        %369 = vmatprep.subr.mxu0 0.0
        %370 = vmatpush1.msra.mxu0 0.0
        %371 = vmatprep.subr.mxu0 0.0
        %372 = vmatpush1.msra.mxu0 0.0
        %373 = vmatprep.subr.mxu0 0.0
        %374 = vmatpush1.msra.mxu0 0.0
        %375 = vmatprep.subr.mxu0 0.0
        %376 = vmatpush1.msra.mxu0 0.0
        %377 = vmatprep.subr.mxu0 0.0
        %378 = vmatpush1.msra.mxu0 0.0
        %379 = vmatprep.subr.mxu0 0.0
        %380 = vmatpush1.msra.mxu0 0.0
        %381 = vmatprep.subr.mxu0 0.0
        %382 = vmatpush1.msra.mxu0 0.0
        %383 = vmatprep.subr.mxu0 0.0
        %384 = vmatpush1.msra.mxu0 0.0
        %385 = vmatprep.subr.mxu0 0.0
        %386 = vmatpush1.msra.mxu0 0.0
        %387 = vmatprep.subr.mxu0 0.0
        %388 = vmatpush1.msra.mxu0 0.0
        %389 = vmatprep.subr.mxu0 0.0
        %390 = vmatpush1.msra.mxu0 0.0
        %391 = vmatprep.subr.mxu0 0.0
        %392 = vmatpush1.msra.mxu0 0.0
        %393 = vmatprep.subr.mxu0 0.0
        %394 = vmatpush1.msra.mxu0 0.0
        %395 = vmatprep.subr.mxu0 0.0
        %396 = vmatpush1.msra.mxu0 0.0
        %397 = vmatprep.subr.mxu0 0.0
        %398 = vmatpush1.msra.mxu0 0.0
        %399 = vmatprep.mubr.f32.mxu0 0.0
        %400 = vmatmul.mubr.f32.gmra.mrb[0].mxu0 %v326
        %v401 = vpop.f32.mrb[0].mxu0
        %v402 = vadd.f32 0.0, %v401
        %v403 = vpop.f32.mrb[0].mxu0
        %v404 = vadd.f32 0.0, %v403
        %405 = vmatprep.mubr.f32.mxu0 0.0
        %406 = vmatmul.mubr.f32.gmra.mrb[0].mxu0 %v329
        %v407 = vpop.f32.mrb[0].mxu0
        %v408 = vadd.f32 0.0, %v407
        %v409 = vpop.f32.mrb[0].mxu0
        %v410 = vadd.f32 0.0, %v409
        %411 = vdwg.mxu0
        %v412 = vadd.f32 %v308, %v402
        %v413 = vadd.f32 %v309, %v404
        %v414 = vadd.f32 %v310, %v408
        %v415 = vadd.f32 %v311, %v410
        %416 = vst [vmem:[#allocation2] sm:$0xff] %v412
        %417 = vst.msk [vmem:[#allocation2 + $0x8] sm:$0xff] %vm303, %v413
        %418 = vst [vmem:[#allocation2 + $0x10] sm:$0x1] %v414
        %419 = vst.msk [vmem:[#allocation2 + $0x18] sm:$0x1] %vm306, %v415
        %v420 = vld [vmem:[#allocation2] sm:$0xff]
        %v421 = vld [vmem:[#allocation2 + $0x8] sm:$0xff]
        %v422 = vld [vmem:[#allocation2 + $0x10] sm:$0x1]
        %v423 = vld [vmem:[#allocation2 + $0x18] sm:$0x1]
        %s424 = scalar_lea.vmem %s1, 32
        %v425 = vld [vmem:[%s424] sm:$0xff]
        %v426 = vld [vmem:[%s424 + $0x8] sm:$0x1]
        %v427 = vld [vmem:[%s206] sm:$0x1f]
        %v428 = vld [vmem:[%s206 + $0x8] sm:$0x1f]
        %431 = vrot.lane.b32.xlu0 %v427, 126
        %v432 = vpop.permute.xlu0 %431
        %433 = vrot.lane.b32.xlu0 %v428, 126
        %v434 = vpop.permute.xlu0 %433
        %vm435 = vcmask 1031168
        %v436 = vsel %vm435, %v432, %v434
        %v438 = vsel %vm211, %v425, 0
        %v441 = vsel %vm211, %v426, 0
        %v443 = vsel %vm218, %v436, 0
        %v445 = vsel %vm218, %v434, 0
        %447 = vmatprep.subr.mxu0 %v445
        %448 = vmatpush1.msra.mxu0 %v443
        %449 = vmatprep.subr.mxu0 0.0
        %450 = vmatpush1.msra.mxu0 0.0
        %451 = vmatprep.subr.mxu0 0.0
        %452 = vmatpush1.msra.mxu0 0.0
        %453 = vmatprep.subr.mxu0 0.0
        %454 = vmatpush1.msra.mxu0 0.0
        %455 = vmatprep.subr.mxu0 0.0
        %456 = vmatpush1.msra.mxu0 0.0
        %457 = vmatprep.subr.mxu0 0.0
        %458 = vmatpush1.msra.mxu0 0.0
        %459 = vmatprep.subr.mxu0 0.0
        %460 = vmatpush1.msra.mxu0 0.0
        %461 = vmatprep.subr.mxu0 0.0
        %462 = vmatpush1.msra.mxu0 0.0
        %463 = vmatprep.subr.mxu0 0.0
        %464 = vmatpush1.msra.mxu0 0.0
        %465 = vmatprep.subr.mxu0 0.0
        %466 = vmatpush1.msra.mxu0 0.0
        %467 = vmatprep.subr.mxu0 0.0
        %468 = vmatpush1.msra.mxu0 0.0
        %469 = vmatprep.subr.mxu0 0.0
        %470 = vmatpush1.msra.mxu0 0.0
        %471 = vmatprep.subr.mxu0 0.0
        %472 = vmatpush1.msra.mxu0 0.0
        %473 = vmatprep.subr.mxu0 0.0
        %474 = vmatpush1.msra.mxu0 0.0
        %475 = vmatprep.subr.mxu0 0.0
        %476 = vmatpush1.msra.mxu0 0.0
        %477 = vmatprep.subr.mxu0 0.0
        %478 = vmatpush1.msra.mxu0 0.0
        %479 = vmatprep.subr.mxu0 0.0
        %480 = vmatpush1.msra.mxu0 0.0
        %481 = vmatprep.subr.mxu0 0.0
        %482 = vmatpush1.msra.mxu0 0.0
        %483 = vmatprep.subr.mxu0 0.0
        %484 = vmatpush1.msra.mxu0 0.0
        %485 = vmatprep.subr.mxu0 0.0
        %486 = vmatpush1.msra.mxu0 0.0
        %487 = vmatprep.subr.mxu0 0.0
        %488 = vmatpush1.msra.mxu0 0.0
        %489 = vmatprep.subr.mxu0 0.0
        %490 = vmatpush1.msra.mxu0 0.0
        %491 = vmatprep.subr.mxu0 0.0
        %492 = vmatpush1.msra.mxu0 0.0
        %493 = vmatprep.subr.mxu0 0.0
        %494 = vmatpush1.msra.mxu0 0.0
        %495 = vmatprep.subr.mxu0 0.0
        %496 = vmatpush1.msra.mxu0 0.0
        %497 = vmatprep.subr.mxu0 0.0
        %498 = vmatpush1.msra.mxu0 0.0
        %499 = vmatprep.subr.mxu0 0.0
        %500 = vmatpush1.msra.mxu0 0.0
        %501 = vmatprep.subr.mxu0 0.0
        %502 = vmatpush1.msra.mxu0 0.0
        %503 = vmatprep.subr.mxu0 0.0
        %504 = vmatpush1.msra.mxu0 0.0
        %505 = vmatprep.subr.mxu0 0.0
        %506 = vmatpush1.msra.mxu0 0.0
        %507 = vmatprep.subr.mxu0 0.0
        %508 = vmatpush1.msra.mxu0 0.0
        %509 = vmatprep.subr.mxu0 0.0
        %510 = vmatpush1.msra.mxu0 0.0
        %511 = vmatprep.mubr.f32.mxu0 0.0
        %512 = vmatmul.mubr.f32.gmra.mrb[0].mxu0 %v438
        %v513 = vpop.f32.mrb[0].mxu0
        %v514 = vadd.f32 0.0, %v513
        %v515 = vpop.f32.mrb[0].mxu0
        %v516 = vadd.f32 0.0, %v515
        %517 = vmatprep.mubr.f32.mxu0 0.0
        %518 = vmatmul.mubr.f32.gmra.mrb[0].mxu0 %v441
        %v519 = vpop.f32.mrb[0].mxu0
        %v520 = vadd.f32 0.0, %v519
        %v521 = vpop.f32.mrb[0].mxu0
        %v522 = vadd.f32 0.0, %v521
        %523 = vdwg.mxu0
        %v524 = vadd.f32 %v420, %v514
        %v525 = vadd.f32 %v421, %v516
        %v526 = vadd.f32 %v422, %v520
        %v527 = vadd.f32 %v423, %v522
        %528 = vst [vmem:[#allocation2] sm:$0xff] %v524
        %529 = vst.msk [vmem:[#allocation2 + $0x8] sm:$0xff] %vm303, %v525
        %530 = vst [vmem:[#allocation2 + $0x10] sm:$0x1] %v526
        %531 = vst.msk [vmem:[#allocation2 + $0x18] sm:$0x1] %vm306, %v527
        %v532 = vld [vmem:[#allocation2] sm:$0xff]
        %v533 = vld [vmem:[#allocation2 + $0x8] sm:$0xff]
        %v534 = vld [vmem:[#allocation2 + $0x10] sm:$0x1]
        %v535 = vld [vmem:[#allocation2 + $0x18] sm:$0x1]
        %s536 = scalar_lea.vmem %s1, 48
        %v537 = vld [vmem:[%s536] sm:$0xff]
        %v538 = vld [vmem:[%s536 + $0x8] sm:$0x1]
        %v539 = vld [vmem:[%s206] sm:$0x1f]
        %v540 = vld [vmem:[%s206 + $0x8] sm:$0x1f]
        %543 = vrot.lane.b32.xlu0 %v539, 110
        %v544 = vpop.permute.xlu0 %543
        %545 = vrot.lane.b32.xlu0 %v540, 110
        %v546 = vpop.permute.xlu0 %545
        %vm547 = vcmask 900096
        %v548 = vsel %vm547, %v544, %v546
        %v550 = vsel %vm211, %v537, 0
        %v553 = vsel %vm211, %v538, 0
        %v555 = vsel %vm218, %v548, 0
        %v557 = vsel %vm218, %v546, 0
        %559 = vmatprep.subr.mxu0 %v557
        %560 = vmatpush1.msra.mxu0 %v555
        %561 = vmatprep.subr.mxu0 0.0
        %562 = vmatpush1.msra.mxu0 0.0
        %563 = vmatprep.subr.mxu0 0.0
        %564 = vmatpush1.msra.mxu0 0.0
        %565 = vmatprep.subr.mxu0 0.0
        %566 = vmatpush1.msra.mxu0 0.0
        %567 = vmatprep.subr.mxu0 0.0
        %568 = vmatpush1.msra.mxu0 0.0
        %569 = vmatprep.subr.mxu0 0.0
        %570 = vmatpush1.msra.mxu0 0.0
        %571 = vmatprep.subr.mxu0 0.0
        %572 = vmatpush1.msra.mxu0 0.0
        %573 = vmatprep.subr.mxu0 0.0
        %574 = vmatpush1.msra.mxu0 0.0
        %575 = vmatprep.subr.mxu0 0.0
        %576 = vmatpush1.msra.mxu0 0.0
        %577 = vmatprep.subr.mxu0 0.0
        %578 = vmatpush1.msra.mxu0 0.0
        %579 = vmatprep.subr.mxu0 0.0
        %580 = vmatpush1.msra.mxu0 0.0
        %581 = vmatprep.subr.mxu0 0.0
        %582 = vmatpush1.msra.mxu0 0.0
        %583 = vmatprep.subr.mxu0 0.0
        %584 = vmatpush1.msra.mxu0 0.0
        %585 = vmatprep.subr.mxu0 0.0
        %586 = vmatpush1.msra.mxu0 0.0
        %587 = vmatprep.subr.mxu0 0.0
        %588 = vmatpush1.msra.mxu0 0.0
        %589 = vmatprep.subr.mxu0 0.0
        %590 = vmatpush1.msra.mxu0 0.0
        %591 = vmatprep.subr.mxu0 0.0
        %592 = vmatpush1.msra.mxu0 0.0
        %593 = vmatprep.subr.mxu0 0.0
        %594 = vmatpush1.msra.mxu0 0.0
        %595 = vmatprep.subr.mxu0 0.0
        %596 = vmatpush1.msra.mxu0 0.0
        %597 = vmatprep.subr.mxu0 0.0
        %598 = vmatpush1.msra.mxu0 0.0
        %599 = vmatprep.subr.mxu0 0.0
        %600 = vmatpush1.msra.mxu0 0.0
        %601 = vmatprep.subr.mxu0 0.0
        %602 = vmatpush1.msra.mxu0 0.0
        %603 = vmatprep.subr.mxu0 0.0
        %604 = vmatpush1.msra.mxu0 0.0
        %605 = vmatprep.subr.mxu0 0.0
        %606 = vmatpush1.msra.mxu0 0.0
        %607 = vmatprep.subr.mxu0 0.0
        %608 = vmatpush1.msra.mxu0 0.0
        %609 = vmatprep.subr.mxu0 0.0
        %610 = vmatpush1.msra.mxu0 0.0
        %611 = vmatprep.subr.mxu0 0.0
        %612 = vmatpush1.msra.mxu0 0.0
        %613 = vmatprep.subr.mxu0 0.0
        %614 = vmatpush1.msra.mxu0 0.0
        %615 = vmatprep.subr.mxu0 0.0
        %616 = vmatpush1.msra.mxu0 0.0
        %617 = vmatprep.subr.mxu0 0.0
        %618 = vmatpush1.msra.mxu0 0.0
        %619 = vmatprep.subr.mxu0 0.0
        %620 = vmatpush1.msra.mxu0 0.0
        %621 = vmatprep.subr.mxu0 0.0
        %622 = vmatpush1.msra.mxu0 0.0
        %623 = vmatprep.mubr.f32.mxu0 0.0
        %624 = vmatmul.mubr.f32.gmra.mrb[0].mxu0 %v550
        %v625 = vpop.f32.mrb[0].mxu0
        %v626 = vadd.f32 0.0, %v625
        %v627 = vpop.f32.mrb[0].mxu0
        %v628 = vadd.f32 0.0, %v627
        %629 = vmatprep.mubr.f32.mxu0 0.0
        %630 = vmatmul.mubr.f32.gmra.mrb[0].mxu0 %v553
        %v631 = vpop.f32.mrb[0].mxu0
        %v632 = vadd.f32 0.0, %v631
        %v633 = vpop.f32.mrb[0].mxu0
        %v634 = vadd.f32 0.0, %v633
        %635 = vdwg.mxu0
        %v636 = vadd.f32 %v532, %v626
        %v637 = vadd.f32 %v533, %v628
        %v638 = vadd.f32 %v534, %v632
        %v639 = vadd.f32 %v535, %v634
        %640 = vst [vmem:[#allocation2] sm:$0xff] %v636
        %641 = vst.msk [vmem:[#allocation2 + $0x8] sm:$0xff] %vm303, %v637
        %642 = vst [vmem:[#allocation2 + $0x10] sm:$0x1] %v638
        %643 = vst.msk [vmem:[#allocation2 + $0x18] sm:$0x1] %vm306, %v639
        %v644 = vld [vmem:[#allocation2] sm:$0xff]
        %v645 = vld [vmem:[#allocation2 + $0x8] sm:$0xff]
        %v646 = vld [vmem:[#allocation2 + $0x10] sm:$0x1]
        %v647 = vld [vmem:[#allocation2 + $0x18] sm:$0x1]
        %s648 = scalar_lea.vmem %s1, 64
        %v649 = vld [vmem:[%s648] sm:$0xff]
        %v650 = vld [vmem:[%s648 + $0x8] sm:$0x1]
        %v651 = vld [vmem:[%s206] sm:$0x1f]
        %v652 = vld [vmem:[%s206 + $0x8] sm:$0x1f]
        %655 = vrot.lane.b32.xlu0 %v651, 109
        %v656 = vpop.permute.xlu0 %655
        %657 = vrot.lane.b32.xlu0 %v652, 109
        %v658 = vpop.permute.xlu0 %657
        %vm659 = vcmask 891904
        %v660 = vsel %vm659, %v656, %v658
        %v662 = vsel %vm211, %v649, 0
        %v665 = vsel %vm211, %v650, 0
        %v667 = vsel %vm218, %v660, 0
        %v669 = vsel %vm218, %v658, 0
        %671 = vmatprep.subr.mxu0 %v669
        %672 = vmatpush1.msra.mxu0 %v667
        %673 = vmatprep.subr.mxu0 0.0
        %674 = vmatpush1.msra.mxu0 0.0
        %675 = vmatprep.subr.mxu0 0.0
        %676 = vmatpush1.msra.mxu0 0.0
        %677 = vmatprep.subr.mxu0 0.0
        %678 = vmatpush1.msra.mxu0 0.0
        %679 = vmatprep.subr.mxu0 0.0
        %680 = vmatpush1.msra.mxu0 0.0
        %681 = vmatprep.subr.mxu0 0.0
        %682 = vmatpush1.msra.mxu0 0.0
        %683 = vmatprep.subr.mxu0 0.0
        %684 = vmatpush1.msra.mxu0 0.0
        %685 = vmatprep.subr.mxu0 0.0
        %686 = vmatpush1.msra.mxu0 0.0
        %687 = vmatprep.subr.mxu0 0.0
        %688 = vmatpush1.msra.mxu0 0.0
        %689 = vmatprep.subr.mxu0 0.0
        %690 = vmatpush1.msra.mxu0 0.0
        %691 = vmatprep.subr.mxu0 0.0
        %692 = vmatpush1.msra.mxu0 0.0
        %693 = vmatprep.subr.mxu0 0.0
        %694 = vmatpush1.msra.mxu0 0.0
        %695 = vmatprep.subr.mxu0 0.0
        %696 = vmatpush1.msra.mxu0 0.0
        %697 = vmatprep.subr.mxu0 0.0
        %698 = vmatpush1.msra.mxu0 0.0
        %699 = vmatprep.subr.mxu0 0.0
        %700 = vmatpush1.msra.mxu0 0.0
        %701 = vmatprep.subr.mxu0 0.0
        %702 = vmatpush1.msra.mxu0 0.0
        %703 = vmatprep.subr.mxu0 0.0
        %704 = vmatpush1.msra.mxu0 0.0
        %705 = vmatprep.subr.mxu0 0.0
        %706 = vmatpush1.msra.mxu0 0.0
        %707 = vmatprep.subr.mxu0 0.0
        %708 = vmatpush1.msra.mxu0 0.0
        %709 = vmatprep.subr.mxu0 0.0
        %710 = vmatpush1.msra.mxu0 0.0
        %711 = vmatprep.subr.mxu0 0.0
        %712 = vmatpush1.msra.mxu0 0.0
        %713 = vmatprep.subr.mxu0 0.0
        %714 = vmatpush1.msra.mxu0 0.0
        %715 = vmatprep.subr.mxu0 0.0
        %716 = vmatpush1.msra.mxu0 0.0
        %717 = vmatprep.subr.mxu0 0.0
        %718 = vmatpush1.msra.mxu0 0.0
        %719 = vmatprep.subr.mxu0 0.0
        %720 = vmatpush1.msra.mxu0 0.0
        %721 = vmatprep.subr.mxu0 0.0
        %722 = vmatpush1.msra.mxu0 0.0
        %723 = vmatprep.subr.mxu0 0.0
        %724 = vmatpush1.msra.mxu0 0.0
        %725 = vmatprep.subr.mxu0 0.0
        %726 = vmatpush1.msra.mxu0 0.0
        %727 = vmatprep.subr.mxu0 0.0
        %728 = vmatpush1.msra.mxu0 0.0
        %729 = vmatprep.subr.mxu0 0.0
        %730 = vmatpush1.msra.mxu0 0.0
        %731 = vmatprep.subr.mxu0 0.0
        %732 = vmatpush1.msra.mxu0 0.0
        %733 = vmatprep.subr.mxu0 0.0
        %734 = vmatpush1.msra.mxu0 0.0
        %735 = vmatprep.mubr.f32.mxu0 0.0
        %736 = vmatmul.mubr.f32.gmra.mrb[0].mxu0 %v662
        %v737 = vpop.f32.mrb[0].mxu0
        %v738 = vadd.f32 0.0, %v737
        %v739 = vpop.f32.mrb[0].mxu0
        %v740 = vadd.f32 0.0, %v739
        %741 = vmatprep.mubr.f32.mxu0 0.0
        %742 = vmatmul.mubr.f32.gmra.mrb[0].mxu0 %v665
        %v743 = vpop.f32.mrb[0].mxu0
        %v744 = vadd.f32 0.0, %v743
        %v745 = vpop.f32.mrb[0].mxu0
        %v746 = vadd.f32 0.0, %v745
        %747 = vdwg.mxu0
        %v748 = vadd.f32 %v644, %v738
        %v749 = vadd.f32 %v645, %v740
        %v750 = vadd.f32 %v646, %v744
        %v751 = vadd.f32 %v647, %v746
        %752 = vst [vmem:[#allocation2] sm:$0xff] %v748
        %753 = vst.msk [vmem:[#allocation2 + $0x8] sm:$0xff] %vm303, %v749
        %754 = vst [vmem:[#allocation2 + $0x10] sm:$0x1] %v750
        %755 = vst.msk [vmem:[#allocation2 + $0x18] sm:$0x1] %vm306, %v751
        %v756 = vld [vmem:[#allocation2] sm:$0xff]
        %v757 = vld [vmem:[#allocation2 + $0x8] sm:$0xff]
        %v758 = vld [vmem:[#allocation2 + $0x10] sm:$0x1]
        %v759 = vld [vmem:[#allocation2 + $0x18] sm:$0x1]
        %s760 = scalar_lea.vmem %s1, 80
        %v761 = vld [vmem:[%s760] sm:$0xff]
        %v762 = vld [vmem:[%s760 + $0x8] sm:$0x1]
        %v763 = vld [vmem:[%s206] sm:$0x1f]
        %v764 = vld [vmem:[%s206 + $0x8] sm:$0x1f]
        %767 = vrot.lane.b32.xlu0 %v763, 108
        %v768 = vpop.permute.xlu0 %767
        %769 = vrot.lane.b32.xlu0 %v764, 108
        %v770 = vpop.permute.xlu0 %769
        %vm771 = vcmask 883712
        %v772 = vsel %vm771, %v768, %v770
        %v774 = vsel %vm211, %v761, 0
        %v777 = vsel %vm211, %v762, 0
        %v779 = vsel %vm218, %v772, 0
        %v781 = vsel %vm218, %v770, 0
        %783 = vmatprep.subr.mxu0 %v781
        %784 = vmatpush1.msra.mxu0 %v779
        %785 = vmatprep.subr.mxu0 0.0
        %786 = vmatpush1.msra.mxu0 0.0
        %787 = vmatprep.subr.mxu0 0.0
        %788 = vmatpush1.msra.mxu0 0.0
        %789 = vmatprep.subr.mxu0 0.0
        %790 = vmatpush1.msra.mxu0 0.0
        %791 = vmatprep.subr.mxu0 0.0
        %792 = vmatpush1.msra.mxu0 0.0
        %793 = vmatprep.subr.mxu0 0.0
        %794 = vmatpush1.msra.mxu0 0.0
        %795 = vmatprep.subr.mxu0 0.0
        %796 = vmatpush1.msra.mxu0 0.0
        %797 = vmatprep.subr.mxu0 0.0
        %798 = vmatpush1.msra.mxu0 0.0
        %799 = vmatprep.subr.mxu0 0.0
        %800 = vmatpush1.msra.mxu0 0.0
        %801 = vmatprep.subr.mxu0 0.0
        %802 = vmatpush1.msra.mxu0 0.0
        %803 = vmatprep.subr.mxu0 0.0
        %804 = vmatpush1.msra.mxu0 0.0
        %805 = vmatprep.subr.mxu0 0.0
        %806 = vmatpush1.msra.mxu0 0.0
        %807 = vmatprep.subr.mxu0 0.0
        %808 = vmatpush1.msra.mxu0 0.0
        %809 = vmatprep.subr.mxu0 0.0
        %810 = vmatpush1.msra.mxu0 0.0
        %811 = vmatprep.subr.mxu0 0.0
        %812 = vmatpush1.msra.mxu0 0.0
        %813 = vmatprep.subr.mxu0 0.0
        %814 = vmatpush1.msra.mxu0 0.0
        %815 = vmatprep.subr.mxu0 0.0
        %816 = vmatpush1.msra.mxu0 0.0
        %817 = vmatprep.subr.mxu0 0.0
        %818 = vmatpush1.msra.mxu0 0.0
        %819 = vmatprep.subr.mxu0 0.0
        %820 = vmatpush1.msra.mxu0 0.0
        %821 = vmatprep.subr.mxu0 0.0
        %822 = vmatpush1.msra.mxu0 0.0
        %823 = vmatprep.subr.mxu0 0.0
        %824 = vmatpush1.msra.mxu0 0.0
        %825 = vmatprep.subr.mxu0 0.0
        %826 = vmatpush1.msra.mxu0 0.0
        %827 = vmatprep.subr.mxu0 0.0
        %828 = vmatpush1.msra.mxu0 0.0
        %829 = vmatprep.subr.mxu0 0.0
        %830 = vmatpush1.msra.mxu0 0.0
        %831 = vmatprep.subr.mxu0 0.0
        %832 = vmatpush1.msra.mxu0 0.0
        %833 = vmatprep.subr.mxu0 0.0
        %834 = vmatpush1.msra.mxu0 0.0
        %835 = vmatprep.subr.mxu0 0.0
        %836 = vmatpush1.msra.mxu0 0.0
        %837 = vmatprep.subr.mxu0 0.0
        %838 = vmatpush1.msra.mxu0 0.0
        %839 = vmatprep.subr.mxu0 0.0
        %840 = vmatpush1.msra.mxu0 0.0
        %841 = vmatprep.subr.mxu0 0.0
        %842 = vmatpush1.msra.mxu0 0.0
        %843 = vmatprep.subr.mxu0 0.0
        %844 = vmatpush1.msra.mxu0 0.0
        %845 = vmatprep.subr.mxu0 0.0
        %846 = vmatpush1.msra.mxu0 0.0
        %847 = vmatprep.mubr.f32.mxu0 0.0
        %848 = vmatmul.mubr.f32.gmra.mrb[0].mxu0 %v774
        %v849 = vpop.f32.mrb[0].mxu0
        %v850 = vadd.f32 0.0, %v849
        %v851 = vpop.f32.mrb[0].mxu0
        %v852 = vadd.f32 0.0, %v851
        %853 = vmatprep.mubr.f32.mxu0 0.0
        %854 = vmatmul.mubr.f32.gmra.mrb[0].mxu0 %v777
        %v855 = vpop.f32.mrb[0].mxu0
        %v856 = vadd.f32 0.0, %v855
        %v857 = vpop.f32.mrb[0].mxu0
        %v858 = vadd.f32 0.0, %v857
        %859 = vdwg.mxu0
        %v860 = vadd.f32 %v756, %v850
        %v861 = vadd.f32 %v757, %v852
        %v862 = vadd.f32 %v758, %v856
        %v863 = vadd.f32 %v759, %v858
        %864 = vst [vmem:[#allocation2] sm:$0xff] %v860
        %865 = vst.msk [vmem:[#allocation2 + $0x8] sm:$0xff] %vm303, %v861
        %866 = vst [vmem:[#allocation2 + $0x10] sm:$0x1] %v862
        %867 = vst.msk [vmem:[#allocation2 + $0x18] sm:$0x1] %vm306, %v863
        %v868 = vld [vmem:[#allocation2] sm:$0xff]
        %v869 = vld [vmem:[#allocation2 + $0x8] sm:$0xff]
        %v870 = vld [vmem:[#allocation2 + $0x10] sm:$0x1]
        %v871 = vld [vmem:[#allocation2 + $0x18] sm:$0x1]
        %s872 = scalar_lea.vmem %s1, 96
        %v873 = vld [vmem:[%s872] sm:$0xff]
        %v874 = vld [vmem:[%s872 + $0x8] sm:$0x1]
        %v875 = vld [vmem:[%s206] sm:$0x1f]
        %v876 = vld [vmem:[%s206 + $0x8] sm:$0x1f]
        %879 = vrot.lane.b32.xlu0 %v875, 92
        %v880 = vpop.permute.xlu0 %879
        %881 = vrot.lane.b32.xlu0 %v876, 92
        %v882 = vpop.permute.xlu0 %881
        %vm883 = vcmask 752640
        %v884 = vsel %vm883, %v880, %v882
        %v886 = vsel %vm211, %v873, 0
        %v889 = vsel %vm211, %v874, 0
        %v891 = vsel %vm218, %v884, 0
        %v893 = vsel %vm218, %v882, 0
        %895 = vmatprep.subr.mxu0 %v893
        %896 = vmatpush1.msra.mxu0 %v891
        %897 = vmatprep.subr.mxu0 0.0
        %898 = vmatpush1.msra.mxu0 0.0
        %899 = vmatprep.subr.mxu0 0.0
        %900 = vmatpush1.msra.mxu0 0.0
        %901 = vmatprep.subr.mxu0 0.0
        %902 = vmatpush1.msra.mxu0 0.0
        %903 = vmatprep.subr.mxu0 0.0
        %904 = vmatpush1.msra.mxu0 0.0
        %905 = vmatprep.subr.mxu0 0.0
        %906 = vmatpush1.msra.mxu0 0.0
        %907 = vmatprep.subr.mxu0 0.0
        %908 = vmatpush1.msra.mxu0 0.0
        %909 = vmatprep.subr.mxu0 0.0
        %910 = vmatpush1.msra.mxu0 0.0
        %911 = vmatprep.subr.mxu0 0.0
        %912 = vmatpush1.msra.mxu0 0.0
        %913 = vmatprep.subr.mxu0 0.0
        %914 = vmatpush1.msra.mxu0 0.0
        %915 = vmatprep.subr.mxu0 0.0
        %916 = vmatpush1.msra.mxu0 0.0
        %917 = vmatprep.subr.mxu0 0.0
        %918 = vmatpush1.msra.mxu0 0.0
        %919 = vmatprep.subr.mxu0 0.0
        %920 = vmatpush1.msra.mxu0 0.0
        %921 = vmatprep.subr.mxu0 0.0
        %922 = vmatpush1.msra.mxu0 0.0
        %923 = vmatprep.subr.mxu0 0.0
        %924 = vmatpush1.msra.mxu0 0.0
        %925 = vmatprep.subr.mxu0 0.0
        %926 = vmatpush1.msra.mxu0 0.0
        %927 = vmatprep.subr.mxu0 0.0
        %928 = vmatpush1.msra.mxu0 0.0
        %929 = vmatprep.subr.mxu0 0.0
        %930 = vmatpush1.msra.mxu0 0.0
        %931 = vmatprep.subr.mxu0 0.0
        %932 = vmatpush1.msra.mxu0 0.0
        %933 = vmatprep.subr.mxu0 0.0
        %934 = vmatpush1.msra.mxu0 0.0
        %935 = vmatprep.subr.mxu0 0.0
        %936 = vmatpush1.msra.mxu0 0.0
        %937 = vmatprep.subr.mxu0 0.0
        %938 = vmatpush1.msra.mxu0 0.0
        %939 = vmatprep.subr.mxu0 0.0
        %940 = vmatpush1.msra.mxu0 0.0
        %941 = vmatprep.subr.mxu0 0.0
        %942 = vmatpush1.msra.mxu0 0.0
        %943 = vmatprep.subr.mxu0 0.0
        %944 = vmatpush1.msra.mxu0 0.0
        %945 = vmatprep.subr.mxu0 0.0
        %946 = vmatpush1.msra.mxu0 0.0
        %947 = vmatprep.subr.mxu0 0.0
        %948 = vmatpush1.msra.mxu0 0.0
        %949 = vmatprep.subr.mxu0 0.0
        %950 = vmatpush1.msra.mxu0 0.0
        %951 = vmatprep.subr.mxu0 0.0
        %952 = vmatpush1.msra.mxu0 0.0
        %953 = vmatprep.subr.mxu0 0.0
        %954 = vmatpush1.msra.mxu0 0.0
        %955 = vmatprep.subr.mxu0 0.0
        %956 = vmatpush1.msra.mxu0 0.0
        %957 = vmatprep.subr.mxu0 0.0
        %958 = vmatpush1.msra.mxu0 0.0
        %959 = vmatprep.mubr.f32.mxu0 0.0
        %960 = vmatmul.mubr.f32.gmra.mrb[0].mxu0 %v886
        %v961 = vpop.f32.mrb[0].mxu0
        %v962 = vadd.f32 0.0, %v961
        %v963 = vpop.f32.mrb[0].mxu0
        %v964 = vadd.f32 0.0, %v963
        %965 = vmatprep.mubr.f32.mxu0 0.0
        %966 = vmatmul.mubr.f32.gmra.mrb[0].mxu0 %v889
        %v967 = vpop.f32.mrb[0].mxu0
        %v968 = vadd.f32 0.0, %v967
        %v969 = vpop.f32.mrb[0].mxu0
        %v970 = vadd.f32 0.0, %v969
        %971 = vdwg.mxu0
        %v972 = vadd.f32 %v868, %v962
        %v973 = vadd.f32 %v869, %v964
        %v974 = vadd.f32 %v870, %v968
        %v975 = vadd.f32 %v871, %v970
        %976 = vst [vmem:[#allocation2] sm:$0xff] %v972
        %977 = vst.msk [vmem:[#allocation2 + $0x8] sm:$0xff] %vm303, %v973
        %978 = vst [vmem:[#allocation2 + $0x10] sm:$0x1] %v974
        %979 = vst.msk [vmem:[#allocation2 + $0x18] sm:$0x1] %vm306, %v975
        %v980 = vld [vmem:[#allocation2] sm:$0xff]
        %v981 = vld [vmem:[#allocation2 + $0x8] sm:$0xff]
        %v982 = vld [vmem:[#allocation2 + $0x10] sm:$0x1]
        %v983 = vld [vmem:[#allocation2 + $0x18] sm:$0x1]
        %s984 = scalar_lea.vmem %s1, 112
        %v985 = vld [vmem:[%s984] sm:$0xff]
        %v986 = vld [vmem:[%s984 + $0x8] sm:$0x1]
        %v987 = vld [vmem:[%s206] sm:$0x1f]
        %v988 = vld [vmem:[%s206 + $0x8] sm:$0x1f]
        %991 = vrot.lane.b32.xlu0 %v987, 91
        %v992 = vpop.permute.xlu0 %991
        %993 = vrot.lane.b32.xlu0 %v988, 91
        %v994 = vpop.permute.xlu0 %993
        %vm995 = vcmask 744448
        %v996 = vsel %vm995, %v992, %v994
        %v998 = vsel %vm211, %v985, 0
        %v1001 = vsel %vm211, %v986, 0
        %v1003 = vsel %vm218, %v996, 0
        %v1005 = vsel %vm218, %v994, 0
        %1007 = vmatprep.subr.mxu0 %v1005
        %1008 = vmatpush1.msra.mxu0 %v1003
        %1009 = vmatprep.subr.mxu0 0.0
        %1010 = vmatpush1.msra.mxu0 0.0
        %1011 = vmatprep.subr.mxu0 0.0
        %1012 = vmatpush1.msra.mxu0 0.0
        %1013 = vmatprep.subr.mxu0 0.0
        %1014 = vmatpush1.msra.mxu0 0.0
        %1015 = vmatprep.subr.mxu0 0.0
        %1016 = vmatpush1.msra.mxu0 0.0
        %1017 = vmatprep.subr.mxu0 0.0
        %1018 = vmatpush1.msra.mxu0 0.0
        %1019 = vmatprep.subr.mxu0 0.0
        %1020 = vmatpush1.msra.mxu0 0.0
        %1021 = vmatprep.subr.mxu0 0.0
        %1022 = vmatpush1.msra.mxu0 0.0
        %1023 = vmatprep.subr.mxu0 0.0
        %1024 = vmatpush1.msra.mxu0 0.0
        %1025 = vmatprep.subr.mxu0 0.0
        %1026 = vmatpush1.msra.mxu0 0.0
        %1027 = vmatprep.subr.mxu0 0.0
        %1028 = vmatpush1.msra.mxu0 0.0
        %1029 = vmatprep.subr.mxu0 0.0
        %1030 = vmatpush1.msra.mxu0 0.0
        %1031 = vmatprep.subr.mxu0 0.0
        %1032 = vmatpush1.msra.mxu0 0.0
        %1033 = vmatprep.subr.mxu0 0.0
        %1034 = vmatpush1.msra.mxu0 0.0
        %1035 = vmatprep.subr.mxu0 0.0
        %1036 = vmatpush1.msra.mxu0 0.0
        %1037 = vmatprep.subr.mxu0 0.0
        %1038 = vmatpush1.msra.mxu0 0.0
        %1039 = vmatprep.subr.mxu0 0.0
        %1040 = vmatpush1.msra.mxu0 0.0
        %1041 = vmatprep.subr.mxu0 0.0
        %1042 = vmatpush1.msra.mxu0 0.0
        %1043 = vmatprep.subr.mxu0 0.0
        %1044 = vmatpush1.msra.mxu0 0.0
        %1045 = vmatprep.subr.mxu0 0.0
        %1046 = vmatpush1.msra.mxu0 0.0
        %1047 = vmatprep.subr.mxu0 0.0
        %1048 = vmatpush1.msra.mxu0 0.0
        %1049 = vmatprep.subr.mxu0 0.0
        %1050 = vmatpush1.msra.mxu0 0.0
        %1051 = vmatprep.subr.mxu0 0.0
        %1052 = vmatpush1.msra.mxu0 0.0
        %1053 = vmatprep.subr.mxu0 0.0
        %1054 = vmatpush1.msra.mxu0 0.0
        %1055 = vmatprep.subr.mxu0 0.0
        %1056 = vmatpush1.msra.mxu0 0.0
        %1057 = vmatprep.subr.mxu0 0.0
        %1058 = vmatpush1.msra.mxu0 0.0
        %1059 = vmatprep.subr.mxu0 0.0
        %1060 = vmatpush1.msra.mxu0 0.0
        %1061 = vmatprep.subr.mxu0 0.0
        %1062 = vmatpush1.msra.mxu0 0.0
        %1063 = vmatprep.subr.mxu0 0.0
        %1064 = vmatpush1.msra.mxu0 0.0
        %1065 = vmatprep.subr.mxu0 0.0
        %1066 = vmatpush1.msra.mxu0 0.0
        %1067 = vmatprep.subr.mxu0 0.0
        %1068 = vmatpush1.msra.mxu0 0.0
        %1069 = vmatprep.subr.mxu0 0.0
        %1070 = vmatpush1.msra.mxu0 0.0
        %1071 = vmatprep.mubr.f32.mxu0 0.0
        %1072 = vmatmul.mubr.f32.gmra.mrb[0].mxu0 %v998
        %v1073 = vpop.f32.mrb[0].mxu0
        %v1074 = vadd.f32 0.0, %v1073
        %v1075 = vpop.f32.mrb[0].mxu0
        %v1076 = vadd.f32 0.0, %v1075
        %1077 = vmatprep.mubr.f32.mxu0 0.0
        %1078 = vmatmul.mubr.f32.gmra.mrb[0].mxu0 %v1001
        %v1079 = vpop.f32.mrb[0].mxu0
        %v1080 = vadd.f32 0.0, %v1079
        %v1081 = vpop.f32.mrb[0].mxu0
        %v1082 = vadd.f32 0.0, %v1081
        %1083 = vdwg.mxu0
        %v1084 = vadd.f32 %v980, %v1074
        %v1085 = vadd.f32 %v981, %v1076
        %v1086 = vadd.f32 %v982, %v1080
        %v1087 = vadd.f32 %v983, %v1082
        %1088 = vst [vmem:[#allocation2] sm:$0xff] %v1084
        %1089 = vst.msk [vmem:[#allocation2 + $0x8] sm:$0xff] %vm303, %v1085
        %1090 = vst [vmem:[#allocation2 + $0x10] sm:$0x1] %v1086
        %1091 = vst.msk [vmem:[#allocation2 + $0x18] sm:$0x1] %vm306, %v1087
        %v1092 = vld [vmem:[#allocation2] sm:$0xff]
        %v1093 = vld [vmem:[#allocation2 + $0x8] sm:$0xff]
        %v1094 = vld [vmem:[#allocation2 + $0x10] sm:$0x1]
        %v1095 = vld [vmem:[#allocation2 + $0x18] sm:$0x1]
        %s1096 = scalar_lea.vmem %s1, 128
        %v1097 = vld [vmem:[%s1096] sm:$0xff]
        %v1098 = vld [vmem:[%s1096 + $0x8] sm:$0x1]
        %v1099 = vld [vmem:[%s206] sm:$0x1f]
        %v1100 = vld [vmem:[%s206 + $0x8] sm:$0x1f]
        %1103 = vrot.lane.b32.xlu0 %v1099, 90
        %v1104 = vpop.permute.xlu0 %1103
        %1105 = vrot.lane.b32.xlu0 %v1100, 90
        %v1106 = vpop.permute.xlu0 %1105
        %vm1107 = vcmask 736256
        %v1108 = vsel %vm1107, %v1104, %v1106
        %v1110 = vsel %vm211, %v1097, 0
        %v1113 = vsel %vm211, %v1098, 0
        %v1115 = vsel %vm218, %v1108, 0
        %v1117 = vsel %vm218, %v1106, 0
        %1119 = vmatprep.subr.mxu0 %v1117
        %1120 = vmatpush1.msra.mxu0 %v1115
        %1121 = vmatprep.subr.mxu0 0.0
        %1122 = vmatpush1.msra.mxu0 0.0
        %1123 = vmatprep.subr.mxu0 0.0
        %1124 = vmatpush1.msra.mxu0 0.0
        %1125 = vmatprep.subr.mxu0 0.0
        %1126 = vmatpush1.msra.mxu0 0.0
        %1127 = vmatprep.subr.mxu0 0.0
        %1128 = vmatpush1.msra.mxu0 0.0
        %1129 = vmatprep.subr.mxu0 0.0
        %1130 = vmatpush1.msra.mxu0 0.0
        %1131 = vmatprep.subr.mxu0 0.0
        %1132 = vmatpush1.msra.mxu0 0.0
        %1133 = vmatprep.subr.mxu0 0.0
        %1134 = vmatpush1.msra.mxu0 0.0
        %1135 = vmatprep.subr.mxu0 0.0
        %1136 = vmatpush1.msra.mxu0 0.0
        %1137 = vmatprep.subr.mxu0 0.0
        %1138 = vmatpush1.msra.mxu0 0.0
        %1139 = vmatprep.subr.mxu0 0.0
        %1140 = vmatpush1.msra.mxu0 0.0
        %1141 = vmatprep.subr.mxu0 0.0
        %1142 = vmatpush1.msra.mxu0 0.0
        %1143 = vmatprep.subr.mxu0 0.0
        %1144 = vmatpush1.msra.mxu0 0.0
        %1145 = vmatprep.subr.mxu0 0.0
        %1146 = vmatpush1.msra.mxu0 0.0
        %1147 = vmatprep.subr.mxu0 0.0
        %1148 = vmatpush1.msra.mxu0 0.0
        %1149 = vmatprep.subr.mxu0 0.0
        %1150 = vmatpush1.msra.mxu0 0.0
        %1151 = vmatprep.subr.mxu0 0.0
        %1152 = vmatpush1.msra.mxu0 0.0
        %1153 = vmatprep.subr.mxu0 0.0
        %1154 = vmatpush1.msra.mxu0 0.0
        %1155 = vmatprep.subr.mxu0 0.0
        %1156 = vmatpush1.msra.mxu0 0.0
        %1157 = vmatprep.subr.mxu0 0.0
        %1158 = vmatpush1.msra.mxu0 0.0
        %1159 = vmatprep.subr.mxu0 0.0
        %1160 = vmatpush1.msra.mxu0 0.0
        %1161 = vmatprep.subr.mxu0 0.0
        %1162 = vmatpush1.msra.mxu0 0.0
        %1163 = vmatprep.subr.mxu0 0.0
        %1164 = vmatpush1.msra.mxu0 0.0
        %1165 = vmatprep.subr.mxu0 0.0
        %1166 = vmatpush1.msra.mxu0 0.0
        %1167 = vmatprep.subr.mxu0 0.0
        %1168 = vmatpush1.msra.mxu0 0.0
        %1169 = vmatprep.subr.mxu0 0.0
        %1170 = vmatpush1.msra.mxu0 0.0
        %1171 = vmatprep.subr.mxu0 0.0
        %1172 = vmatpush1.msra.mxu0 0.0
        %1173 = vmatprep.subr.mxu0 0.0
        %1174 = vmatpush1.msra.mxu0 0.0
        %1175 = vmatprep.subr.mxu0 0.0
        %1176 = vmatpush1.msra.mxu0 0.0
        %1177 = vmatprep.subr.mxu0 0.0
        %1178 = vmatpush1.msra.mxu0 0.0
        %1179 = vmatprep.subr.mxu0 0.0
        %1180 = vmatpush1.msra.mxu0 0.0
        %1181 = vmatprep.subr.mxu0 0.0
        %1182 = vmatpush1.msra.mxu0 0.0
        %1183 = vmatprep.mubr.f32.mxu0 0.0
        %1184 = vmatmul.mubr.f32.gmra.mrb[0].mxu0 %v1110
        %v1185 = vpop.f32.mrb[0].mxu0
        %v1186 = vadd.f32 0.0, %v1185
        %v1187 = vpop.f32.mrb[0].mxu0
        %v1188 = vadd.f32 0.0, %v1187
        %1189 = vmatprep.mubr.f32.mxu0 0.0
        %1190 = vmatmul.mubr.f32.gmra.mrb[0].mxu0 %v1113
        %v1191 = vpop.f32.mrb[0].mxu0
        %v1192 = vadd.f32 0.0, %v1191
        %v1193 = vpop.f32.mrb[0].mxu0
        %v1194 = vadd.f32 0.0, %v1193
        %1195 = vdwg.mxu0
        %v1196 = vadd.f32 %v1092, %v1186
        %v1197 = vadd.f32 %v1093, %v1188
        %v1198 = vadd.f32 %v1094, %v1192
        %v1199 = vadd.f32 %v1095, %v1194
        %1200 = vst [vmem:[#allocation2] sm:$0xff] %v1196
        %1201 = vst.msk [vmem:[#allocation2 + $0x8] sm:$0xff] %vm303, %v1197
        %1202 = vst [vmem:[#allocation2 + $0x10] sm:$0x1] %v1198
        %1203 = vst.msk [vmem:[#allocation2 + $0x18] sm:$0x1] %vm306, %v1199
        %v1204 = vld [vmem:[#allocation2] sm:$0xff]
        %v1205 = vld [vmem:[#allocation2 + $0x8] sm:$0xff]
        %v1206 = vld [vmem:[#allocation2 + $0x10] sm:$0x1]
        %v1207 = vld [vmem:[#allocation2 + $0x18] sm:$0x1]
        %vm1208 = vcmp.eq.f32.partialorder %v1206, 0.0
        %vm1209 = vcmp.eq.f32.partialorder %v1207, 0.0
        %v1210 = vsel %vm1208, 1.0, %v1206
        %v1211 = vsel %vm1209, 1.0, %v1207
        %v1212 = vrcp.pop %v1210
        %v1213 = vrcp.pop %v1211
        %v1214 = vlaneseq
        %v1215 = vshrl.u32 %v1214, 7
        %v1216 = vsub.s32 0, %v1215
        %v1217 = vrot.slane %v1212, %v1216
        %v1218 = vlaneseq
        %v1219 = vshrl.u32 %v1218, 7
        %v1220 = vsub.s32 0, %v1219
        %v1221 = vrot.slane %v1213, %v1220
        %v1222 = vmul.f32 %v1204, %v1217
        %v1223 = vmul.f32 %v1205, %v1221
        %v1224 = vld [vmem:[%s2] sm:$0xff]
        %1226 = vset.pattern.permute.xlu0 0
        %1227 = vperm.xlu0 %1226, %v1224
        %v1228 = vpop.permute.xlu0 %1227
        %v1230 = vadd.f32 %v1222, %v1228
        %v1231 = vadd.f32 %v1223, %v1228
        %v1232 = vsel %vm1208, 1, 0
        %v1233 = vsel %vm1209, 1, 0
        %v1234 = vlaneseq
        %v1235 = vshrl.u32 %v1234, 7
        %v1236 = vsub.s32 0, %v1235
        %v1237 = vrot.slane %v1232, %v1236
        %v1238 = vlaneseq
        %v1239 = vshrl.u32 %v1238, 7
        %v1240 = vsub.s32 0, %v1239
        %v1241 = vrot.slane %v1233, %v1240
        %vm1242 = vcmp.eq.s32.totalorder %v1237, 1
        %vm1243 = vcmp.eq.s32.totalorder %v1241, 1
        %v1244 = vsel %vm1242, 0.0, %v1230
        %v1245 = vsel %vm1243, 0.0, %v1231
        %1246 = vst [vmem:[%s194] sm:$0xff] %v1244
        %1247 = vst.msk [vmem:[%s194 + $0x8] sm:$0xff] %vm303, %v1245
        %v1248 = vsel %vm1208, 0.0, 1.0
        %v1249 = vsel %vm1209, 0.0, 1.0
        %v1252 = vcombine.low %v1248, %v1249
        %v1254 = vunpack.c.l.s4 1966171168
        %v1255 = vunpack.c.0.s8 %v1254
        %v1256 = vlaneseq
        %v1257 = vshrl.u32 %v1256, 7
        %v1258 = vsub.s32 %v1255, %v1257
        %v1259 = vrot.slane %v1252, %v1258
        %v1261 = vunpack.c.l.s4 1966171168
        %v1262 = vunpack.c.0.s8 %v1261
        %v1263 = vlaneseq
        %v1264 = vshrl.u32 %v1263, 7
        %v1265 = vsub.s32 %v1262, %v1264
        %v1266 = vrot.slane %v1259, %v1265
        %v1268 = vlaneseq
        %vm1269 = vcmp.ge.s32.totalorder %v1268, 0
        %vm1270 = vcmp.lt.s32.totalorder %v1268, 144
        %vm1271 = vmand %vm1269, %vm1270
        %1272 = vst.msk [vmem:[%s201] sm:$0x3] %vm1271, %v1266
        %s1273 = sand.u32 %s98, 1
        %s1274 = scalar_lea.sflag [#allocation4], %s1273
        %s1275 = sand.u32 %s98, 1
        %s1276 = smul.addr %s1275, 16
        %s1277 = scalar_lea.vmem [#allocation3], %s1276
        %s1278 = sand.u32 %s124, 1
        %s1279 = scalar_lea.sflag [#allocation6], %s1278
        %s1280 = sand.u32 %s124, 1
        %s1281 = smul.addr %s1280, 2
        %s1282 = scalar_lea.vmem [#allocation5], %s1281
        // Predicated region
        $region33: #{tpu_custom_call.1} parent=31 // pred_check
          %p1283 = pneg %p108
        $region34: #{tpu_custom_call.1} parent=31 // pred_check_branch
          %1285 = sbr.rel (%p1283) target = $region36
        $region35: #{tpu_custom_call.1} parent=31 // pred_region
          %s1287 = ssub.s32 256, 256
          %1288 = vsyncadd %s1274, %s1287
          %s1289 = smul.addr %s22, 2
          %s1290 = smul.addr %s1289, 128
          %s1291 = scalar_lea.hbm %s3, %s1290
          %s1293 = sshll.u32 %s1277, 4
          %s1294 = int_to_ptr.vmem [resolvable:$true] %s1293
          %1296 = dma.vmem_to_hbm [thread:$0]  %s1294, 256, %s1291, %s1274
        $region36: #{tpu_custom_call.1} parent=31 // pred_fallthru
          _
        // Predicated region
        $region37: #{tpu_custom_call.1} parent=31 // pred_check
          %p1297 = pneg %p134
        $region38: #{tpu_custom_call.1} parent=31 // pred_check_branch
          %1299 = sbr.rel (%p1297) target = $region40
        $region39: #{tpu_custom_call.1} parent=31 // pred_region
          %s1301 = ssub.s32 32, 32
          %1302 = vsyncadd %s1279, %s1301
          %s1303 = smul.addr %s22, 2
          %s1304 = smul.addr %s1303, 16
          %s1305 = scalar_lea.hbm %s4, %s1304
          %s1307 = sshll.u32 %s1282, 4
          %s1308 = int_to_ptr.vmem [resolvable:$true] %s1307
          %1310 = dma.vmem_to_hbm [thread:$0]  %s1308, 32, %s1305, %s1279
        $region40: #{tpu_custom_call.1} parent=31 // pred_fallthru
          _
      $region32: #{tpu_custom_call.1} parent=5 // pred_fallthru
        _
      %p1311 = scmp.le.s32.totalorder 2, %s17
      // Predicated region
      $region41: #{tpu_custom_call.1} parent=5 // pred_check
        %p1312 = pneg %p1311
      $region42: #{tpu_custom_call.1} parent=5 // pred_check_branch
        %1314 = sbr.rel (%p1312) target = $region44
      $region43: #{tpu_custom_call.1} parent=5 // pred_region
        %s1315 = ssub.s32 %s17, 2
        // Predicated region
        $region45: #{tpu_custom_call.1} parent=43 // pred_check
          %p1316 = pneg %p114
        $region46: #{tpu_custom_call.1} parent=43 // pred_check_branch
          %1318 = sbr.rel (%p1316) target = $region48
        $region47: #{tpu_custom_call.1} parent=43 // pred_region
          %s1319 = sand.u32 %s99, 1
          %s1320 = scalar_lea.sflag [#allocation4], %s1319
          %s1321 = sand.u32 %s99, 1
          %s1322 = smul.addr %s1321, 16
          %s1323 = scalar_lea.vmem [#allocation3], %s1322
          %1324 = dma.done %s1320, 256
        $region48: #{tpu_custom_call.1} parent=43 // pred_fallthru
          _
        // Predicated region
        $region49: #{tpu_custom_call.1} parent=43 // pred_check
          %p1325 = pneg %p140
        $region50: #{tpu_custom_call.1} parent=43 // pred_check_branch
          %1327 = sbr.rel (%p1325) target = $region52
        $region51: #{tpu_custom_call.1} parent=43 // pred_region
          %s1328 = sand.u32 %s125, 1
          %s1329 = scalar_lea.sflag [#allocation6], %s1328
          %s1330 = sand.u32 %s125, 1
          %s1331 = smul.addr %s1330, 2
          %s1332 = scalar_lea.vmem [#allocation5], %s1331
          %1333 = dma.done %s1329, 32
        $region52: #{tpu_custom_call.1} parent=43 // pred_fallthru
          _
      $region44: #{tpu_custom_call.1} parent=5 // pred_fallthru
        _
    $region6: #{tpu_custom_call.1} parent=1 // loop_footer
      %s21 = sadd.s32 1, %s17
    $region7: #{tpu_custom_call.1} parent=1 // loop_footer_branch
      %16 = sbr.rel target = $region3
    $region8: #{tpu_custom_call.1} parent=1 // loop_exit
      _
    %1334 = vsyncpa [#allocation4], 1
    %s1335 = scalar_lea.sflag [#allocation4], 1
    %1336 = vsyncpa %s1335, 1
    %1337 = vsyncpa [#allocation6], 1
    %s1338 = scalar_lea.sflag [#allocation6], 1
    %1339 = vsyncpa %s1338, 1

</llo_original>
